<compile_context>
chip_gen: v7x
topology: tpu7x:2x2x1
jax: 0.10.0
libtpu: 0.0.40
codegen_flags: <defaults>
</compile_context>

<pallas_src>
import functools

import jax
import jax.numpy as jnp
from jax.experimental import pallas as pl
from jax.experimental.pallas import tpu as pltpu

EPS = 1e-5


def _vmem_limit_bytes():
    # Generation-aware scoped-VMEM cap: ~3/4 of physical VMEM, capped at
    # 96 MiB (v5e/v6e: 128 MiB -> 96 MiB; v7x: 64 MiB -> 48 MiB).
    try:
        cap = int(pltpu.get_tpu_info().vmem_capacity_bytes)
    except Exception:
        cap = 64 * 1024 * 1024
    return max(32 * 1024 * 1024, min((cap * 3) // 4, 96 * 1024 * 1024))


def _pick_tile_rows(h, n):
    """Row-tile height: H % TH == 0, preferring >= 8 total grid steps."""
    for th in (8, 4, 2, 1):
        if h % th == 0 and n * (h // th) >= 8:
            return th
    for th in (8, 4, 2, 1):
        if h % th == 0:
            return th
    return h


# --------------------------------------------------------------------------
# Kernel 1/2: fused 3x3 conv (9 accumulated MXU dots) + per-tile BN partials.
# Optionally applies a per-channel affine (folded previous BN) + ReLU to the
# input first (used for conv2's input = relu(bn1(conv1_raw))).
# --------------------------------------------------------------------------
def conv3x3_kernel(x_ref, w_ref, scale_ref, shift_ref, y_ref, stats_ref,
                   xp_scr, *, th, apply_affine, apply_relu):
    # x_ref:     (1, H, W, Cin)   full image for this batch element
    # w_ref:     (9, Cin, Cout)   tap-major packed weights
    # scale_ref: (1, Cin)         folded BN scale (read iff apply_affine)
    # shift_ref: (1, Cin)         folded BN shift (read iff apply_affine)
    # y_ref:     (1, TH, W, Cout) raw conv output rows of this tile
    # stats_ref: (1, 1, 2, Cout)  per-tile [sum, centered-M2] BN partials
    # xp_scr:    (TH+2, W+2, Cin) zero-padded input slab for this tile
    W = x_ref.shape[2]
    cin = x_ref.shape[3]
    cout = y_ref.shape[3]
    r = pl.program_id(1)
    nr = pl.num_programs(1)
    row0 = pl.multiple_of(r * th, th)

    def pre(v):
        if apply_affine:
            v = v * scale_ref[...] + shift_ref[...]
        if apply_relu:
            v = jnp.maximum(v, 0.0)
        return v

    # Side halo columns: always zero (conv pads AFTER the activation).
    zcol = jnp.zeros((th + 2, 1, cin), jnp.float32)
    xp_scr[:, 0:1, :] = zcol
    xp_scr[:, W + 1:W + 2, :] = zcol

    # Interior rows of this tile.
    xp_scr[1:th + 1, 1:W + 1, :] = pre(x_ref[0, pl.ds(row0, th), :, :])

    # Top / bottom halo rows (zero at the image border, neighbor rows inside).
    zrow = jnp.zeros((1, W, cin), jnp.float32)

    @pl.when(r == 0)
    def _():
        xp_scr[0:1, 1:W + 1, :] = zrow

    @pl.when(r > 0)
    def _():
        xp_scr[0:1, 1:W + 1, :] = pre(x_ref[0, pl.ds(row0 - 1, 1), :, :])

    @pl.when(r == nr - 1)
    def _():
        xp_scr[th + 1:th + 2, 1:W + 1, :] = zrow

    @pl.when(r < nr - 1)
    def _():
        xp_scr[th + 1:th + 2, 1:W + 1, :] = pre(
            x_ref[0, pl.ds(row0 + th, 1), :, :])

    # 9 accumulated MXU dots, one per tap, K = Cin real channels.  No im2col
    # concatenation / 9x-wide temp; accumulator adds are slack-slot filler.
    acc = jnp.zeros((th * W, cout), jnp.float32)
    for t in range(9):
        dy, dx = divmod(t, 3)
        tap = xp_scr[dy:dy + th, dx:dx + W, :].reshape(th * W, cin)
        acc = acc + jnp.dot(tap, w_ref[t], preferred_element_type=jnp.float32)

    y_ref[...] = acc.reshape(1, th, W, cout)

    # One-pass BN partials for this tile: [sum, centered M2], single store.
    ssum = jnp.sum(acc, axis=0, keepdims=True)               # (1, Cout)
    tmean = ssum * (1.0 / (th * W))
    d = acc - tmean
    sm2 = jnp.sum(d * d, axis=0, keepdims=True)              # (1, Cout)
    stats_ref[...] = jnp.concatenate([ssum, sm2], axis=0).reshape(1, 1, 2, cout)


def _conv3x3(x, w, scale, shift, *, th, apply_affine, apply_relu):
    """x: (N,H,W,Cin) f32; w: (9,Cin,Cout); scale/shift: (1,Cin).
    Returns raw conv output (N,H,W,Cout) and per-tile stats (N,R,2,Cout)."""
    N, H, W, Cin = x.shape
    Cout = w.shape[2]
    R = H // th
    kernel = functools.partial(conv3x3_kernel, th=th,
                               apply_affine=apply_affine, apply_relu=apply_relu)

    flops = 2 * N * H * W * 9 * Cin * Cout
    bytes_accessed = 4 * (x.size + w.size + N * H * W * Cout + N * R * 2 * Cout)

    return pl.pallas_call(
        kernel,
        out_shape=(jax.ShapeDtypeStruct((N, H, W, Cout), jnp.float32),
                   jax.ShapeDtypeStruct((N, R, 2, Cout), jnp.float32)),
        grid=(N, R),
        in_specs=[
            # Full image per batch element; block index is constant over the
            # row axis, so it is DMA'd only once per batch element.
            pl.BlockSpec((1, H, W, Cin), lambda b, r: (b, 0, 0, 0)),
            pl.BlockSpec((9, Cin, Cout), lambda b, r: (0, 0, 0)),
            pl.BlockSpec((1, Cin), lambda b, r: (0, 0)),
            pl.BlockSpec((1, Cin), lambda b, r: (0, 0)),
        ],
        out_specs=(
            pl.BlockSpec((1, th, W, Cout), lambda b, r: (b, r, 0, 0)),
            pl.BlockSpec((1, 1, 2, Cout), lambda b, r: (b, r, 0, 0)),
        ),
        scratch_shapes=[pltpu.VMEM((th + 2, W + 2, Cin), jnp.float32)],
        compiler_params=pltpu.CompilerParams(
            dimension_semantics=("parallel", "parallel"),
            vmem_limit_bytes=_vmem_limit_bytes()),
        cost_estimate=pl.CostEstimate(flops=flops, transcendentals=0,
                                      bytes_accessed=bytes_accessed),
    )(x, w, scale, shift)


# --------------------------------------------------------------------------
# Kernel 3: bn2 (folded scale/shift) + identity residual + ReLU.
# --------------------------------------------------------------------------
def finish_kernel(y_ref, scale_ref, shift_ref, res_ref, out_ref):
    out = y_ref[...] * scale_ref[...] + shift_ref[...] + res_ref[...]
    out_ref[...] = jnp.maximum(out, 0.0)


def _finish(y, scale, shift, res, *, th):
    N, H, W, C = y.shape
    return pl.pallas_call(
        finish_kernel,
        out_shape=jax.ShapeDtypeStruct((N, H, W, C), jnp.float32),
        grid=(N, H // th),
        in_specs=[
            pl.BlockSpec((1, th, W, C), lambda b, r: (b, r, 0, 0)),
            pl.BlockSpec((1, C), lambda b, r: (0, 0)),
            pl.BlockSpec((1, C), lambda b, r: (0, 0)),
            pl.BlockSpec((1, th, W, C), lambda b, r: (b, r, 0, 0)),
        ],
        out_specs=pl.BlockSpec((1, th, W, C), lambda b, r: (b, r, 0, 0)),
        compiler_params=pltpu.CompilerParams(
            dimension_semantics=("parallel", "parallel"),
            vmem_limit_bytes=_vmem_limit_bytes()),
        cost_estimate=pl.CostEstimate(
            flops=4 * y.size, transcendentals=0,
            bytes_accessed=4 * (3 * y.size)),
    )(y, scale, shift, res)


# --------------------------------------------------------------------------
# Public wrapper: PyTorch-style NCHW / OIHW in, NCHW out.
# --------------------------------------------------------------------------
def resnet_block(x_nchw, w1, g1, b1, w2, g2, b2):
    N, C, H, W = x_nchw.shape
    f32 = jnp.float32
    th = _pick_tile_rows(H, N)
    tile_n = th * W
    cnt = N * H * W

    # NCHW -> NHWC, no channel padding (kernels use the real channel width).
    x = jnp.transpose(x_nchw, (0, 2, 3, 1)).astype(f32)

    def pack_w(w):
        # (O, I, 3, 3) -> (9, I, O), tap-major (dy*3 + dx).
        return jnp.transpose(w, (2, 3, 1, 0)).reshape(
            9, w.shape[1], w.shape[0]).astype(f32)

    w1p, w2p = pack_w(w1), pack_w(w2)

    def fold_bn(stats, g, b):
        # stats: (N, R, 2, Cout) per-tile [sum, centered M2].  Chan's parallel
        # combine (numerically stable vs. E[x^2] - mean^2), biased variance as
        # used by PyTorch BN in training-mode forward.
        s = stats[:, :, 0, :]
        m2 = stats[:, :, 1, :]
        mean = jnp.sum(s, axis=(0, 1)) / cnt
        tmean = s / tile_n
        M2 = jnp.sum(m2, axis=(0, 1)) + jnp.sum(
            tile_n * (tmean - mean) ** 2, axis=(0, 1))
        var = M2 / cnt
        inv = jax.lax.rsqrt(var + EPS)
        scale = g.astype(f32) * inv
        shift = b.astype(f32) - mean * scale
        return scale.reshape(1, -1), shift.reshape(1, -1)

    dummy = jnp.zeros((1, C), f32)  # never read when apply_affine=False

    # phase 1: conv1 + bn1 partial stats (identity pre-op skipped entirely).
    y1_raw, s1 = _conv3x3(x, w1p, dummy, dummy, th=th,
                          apply_affine=False, apply_relu=False)
    scale1, shift1 = fold_bn(s1, g1, b1)

    # phase 2: (bn1 + relu) fused into conv2's input; conv2 + bn2 partial stats.
    y2_raw, s2 = _conv3x3(y1_raw, w2p, scale1, shift1, th=th,
                          apply_affine=True, apply_relu=True)
    scale2, shift2 = fold_bn(s2, g2, b2)

    # phase 3: bn2 + identity residual + relu.
    out = _finish(y2_raw, scale2, shift2, x, th=th)

    # NHWC -> NCHW on the small, unpadded result.
    # TODO(synk): fold into the finish kernel's output layout if the consumer
    # can accept NHWC.
    return jnp.transpose(out, (0, 3, 1, 2))


# --------------------------------------------------------------------------
# Pure-JAX reference (PyTorch training-mode forward) and self-test.
# --------------------------------------------------------------------------
def ref_block(x, w1, g1, b1, w2, g2, b2):
    conv = functools.partial(
        jax.lax.conv_general_dilated,
        window_strides=(1, 1), padding=((1, 1), (1, 1)),
        dimension_numbers=("NCHW", "OIHW", "NCHW"))

    def bn(y, g, b):
        m = y.mean(axis=(0, 2, 3), keepdims=True)
        v = ((y - m) ** 2).mean(axis=(0, 2, 3), keepdims=True)
        return ((y - m) / jnp.sqrt(v + EPS) * g.reshape(1, -1, 1, 1)
                + b.reshape(1, -1, 1, 1))

    h = jnp.maximum(bn(conv(x, w1), g1, b1), 0.0)
    h = bn(conv(h, w2), g2, b2)
    return jnp.maximum(h + x, 0.0)


if __name__ == "__main__":
    key = jax.random.PRNGKey(0)
    k = jax.random.split(key, 7)

    # in_channel == out_channel, stride=1, downsize=None -> identity residual.
    N, C, H, W = 2, 4, 16, 16
    Cout = C

    x = jax.random.normal(k[0], (N, C, H, W), dtype=jnp.float32)
    w1 = jax.random.normal(k[1], (Cout, C, 3, 3), dtype=jnp.float32) * 0.1
    w2 = jax.random.normal(k[2], (Cout, Cout, 3, 3), dtype=jnp.float32) * 0.1
    g1 = 1.0 + 0.1 * jax.random.normal(k[3], (Cout,), dtype=jnp.float32)
    b1 = 0.1 * jax.random.normal(k[4], (Cout,), dtype=jnp.float32)
    g2 = 1.0 + 0.1 * jax.random.normal(k[5], (Cout,), dtype=jnp.float32)
    b2 = 0.1 * jax.random.normal(k[6], (Cout,), dtype=jnp.float32)

    out = resnet_block(x, w1, g1, b1, w2, g2, b2)
    out = jax.block_until_ready(out)

    ref = jax.block_until_ready(ref_block(x, w1, g1, b1, w2, g2, b2))
    assert out.shape == (N, C, H, W)
    assert jnp.allclose(out, ref, atol=1e-4, rtol=1e-4), \
        float(jnp.abs(out - ref).max())

    print("KERNEL_OK")
</pallas_src>

<mosaic_0001>
module attributes {stable_mosaic.version = 11 : i64} {
  func.func @conv3x3_kernel(%arg0: i32, %arg1: i32, %arg2: memref<1x16x16x4xf32, #tpu.memory_space<vmem>>, %arg3: memref<9x4x4xf32, #tpu.memory_space<vmem>>, %arg4: memref<1x4xf32, #tpu.memory_space<vmem>>, %arg5: memref<1x4xf32, #tpu.memory_space<vmem>>, %arg6: memref<1x4x16x4xf32, #tpu.memory_space<vmem>>, %arg7: memref<1x1x2x4xf32, #tpu.memory_space<vmem>>, %arg8: memref<6x18x4xf32, #tpu.memory_space<vmem>>) attributes {dimension_semantics = [#tpu.dimension_semantics<parallel>, #tpu.dimension_semantics<parallel>], iteration_bounds = array<i64: 2, 4>, scalar_prefetch = 0 : i64, scratch_operands = 1 : i64, tpu.core_type = #tpu.core_type<tc>, window_params = [{transform_indices = @transform_0, window_bounds = array<i64: 1, 16, 16, 4>}, {pipeline_mode = #tpu.pipeline_mode<synchronous>, transform_indices = @transform_1, window_bounds = array<i64: 9, 4, 4>}, {pipeline_mode = #tpu.pipeline_mode<synchronous>, transform_indices = @transform_2, window_bounds = array<i64: 1, 4>}, {pipeline_mode = #tpu.pipeline_mode<synchronous>, transform_indices = @transform_3, window_bounds = array<i64: 1, 4>}, {transform_indices = @transform_4, window_bounds = array<i64: 1, 4, 16, 4>}, {transform_indices = @transform_5, window_bounds = array<i64: 1, 1, 2, 4>}]} {
    %c4_i32 = arith.constant 4 : i32
    %0 = arith.muli %arg1, %c4_i32 : i32
    %1 = tpu.assume_multiple %0, 4 : i32
    %cst = arith.constant 0.000000e+00 : f32
    %2 = vector.broadcast %cst : f32 to vector<6x1x4xf32>
    %c0 = arith.constant 0 : index
    %c0_0 = arith.constant 0 : index
    %c0_1 = arith.constant 0 : index
    %3 = vector.load %arg8[%c0, %c0_0, %c0_1] : memref<6x18x4xf32, #tpu.memory_space<vmem>>, vector<6x1x4xf32>
    tpu.vector_store %arg8[%c0, %c0_0, %c0_1], %2 {strides = array<i32>} : memref<6x18x4xf32, #tpu.memory_space<vmem>>, vector<6x1x4xf32>,
    %c0_2 = arith.constant 0 : index
    %c17 = arith.constant 17 : index
    %c0_3 = arith.constant 0 : index
    %4 = vector.load %arg8[%c0_2, %c17, %c0_3] : memref<6x18x4xf32, #tpu.memory_space<vmem>>, vector<6x1x4xf32>
    tpu.vector_store %arg8[%c0_2, %c17, %c0_3], %2 {strides = array<i32>} : memref<6x18x4xf32, #tpu.memory_space<vmem>>, vector<6x1x4xf32>,
    %c0_4 = arith.constant 0 : index
    %5 = arith.index_cast %1 : i32 to index
    %c0_5 = arith.constant 0 : index
    %c0_6 = arith.constant 0 : index
    %6 = vector.load %arg2[%c0_4, %5, %c0_5, %c0_6] : memref<1x16x16x4xf32, #tpu.memory_space<vmem>>, vector<1x4x16x4xf32>
    %7 = vector.shape_cast %6 : vector<1x4x16x4xf32> to vector<4x16x4xf32>
    %c1 = arith.constant 1 : index
    %c1_7 = arith.constant 1 : index
    %c0_8 = arith.constant 0 : index
    %8 = vector.load %arg8[%c1, %c1_7, %c0_8] : memref<6x18x4xf32, #tpu.memory_space<vmem>>, vector<4x16x4xf32>
    tpu.vector_store %arg8[%c1, %c1_7, %c0_8], %7 {strides = array<i32>} : memref<6x18x4xf32, #tpu.memory_space<vmem>>, vector<4x16x4xf32>,
    %cst_9 = arith.constant 0.000000e+00 : f32
    %9 = vector.broadcast %cst_9 : f32 to vector<1x16x4xf32>
    %c0_i32 = arith.constant 0 : i32
    %10 = arith.cmpi eq, %arg1, %c0_i32 : i32
    %11 = arith.extui %10 : i1 to i32
    %c0_i32_10 = arith.constant 0 : i32
    %12 = arith.cmpi ne, %11, %c0_i32_10 : i32
    scf.if %12 {
      %c0_84 = arith.constant 0 : index
      %c1_85 = arith.constant 1 : index
      %c0_86 = arith.constant 0 : index
      %91 = vector.load %arg8[%c0_84, %c1_85, %c0_86] : memref<6x18x4xf32, #tpu.memory_space<vmem>>, vector<1x16x4xf32>
      tpu.vector_store %arg8[%c0_84, %c1_85, %c0_86], %9 {strides = array<i32>} : memref<6x18x4xf32, #tpu.memory_space<vmem>>, vector<1x16x4xf32>,
    } else {
    }
    %c0_i32_11 = arith.constant 0 : i32
    %13 = arith.cmpi sgt, %arg1, %c0_i32_11 : i32
    %14 = arith.extui %13 : i1 to i32
    %c0_i32_12 = arith.constant 0 : i32
    %15 = arith.cmpi ne, %14, %c0_i32_12 : i32
    scf.if %15 {
      %c1_i32 = arith.constant 1 : i32
      %91 = arith.subi %1, %c1_i32 : i32
      %c0_84 = arith.constant 0 : index
      %92 = arith.index_cast %91 : i32 to index
      %c0_85 = arith.constant 0 : index
      %c0_86 = arith.constant 0 : index
      %93 = vector.load %arg2[%c0_84, %92, %c0_85, %c0_86] : memref<1x16x16x4xf32, #tpu.memory_space<vmem>>, vector<1x1x16x4xf32>
      %94 = vector.shape_cast %93 : vector<1x1x16x4xf32> to vector<1x16x4xf32>
      %c0_87 = arith.constant 0 : index
      %c1_88 = arith.constant 1 : index
      %c0_89 = arith.constant 0 : index
      %95 = vector.load %arg8[%c0_87, %c1_88, %c0_89] : memref<6x18x4xf32, #tpu.memory_space<vmem>>, vector<1x16x4xf32>
      tpu.vector_store %arg8[%c0_87, %c1_88, %c0_89], %94 {strides = array<i32>} : memref<6x18x4xf32, #tpu.memory_space<vmem>>, vector<1x16x4xf32>,
    } else {
    }
    %c3_i32 = arith.constant 3 : i32
    %16 = arith.cmpi eq, %arg1, %c3_i32 : i32
    %17 = arith.extui %16 : i1 to i32
    %c0_i32_13 = arith.constant 0 : i32
    %18 = arith.cmpi ne, %17, %c0_i32_13 : i32
    scf.if %18 {
      %c5_84 = arith.constant 5 : index
      %c1_85 = arith.constant 1 : index
      %c0_86 = arith.constant 0 : index
      %91 = vector.load %arg8[%c5_84, %c1_85, %c0_86] : memref<6x18x4xf32, #tpu.memory_space<vmem>>, vector<1x16x4xf32>
      tpu.vector_store %arg8[%c5_84, %c1_85, %c0_86], %9 {strides = array<i32>} : memref<6x18x4xf32, #tpu.memory_space<vmem>>, vector<1x16x4xf32>,
    } else {
    }
    %c3_i32_14 = arith.constant 3 : i32
    %19 = arith.cmpi slt, %arg1, %c3_i32_14 : i32
    %20 = arith.extui %19 : i1 to i32
    %c0_i32_15 = arith.constant 0 : i32
    %21 = arith.cmpi ne, %20, %c0_i32_15 : i32
    scf.if %21 {
      %c4_i32_84 = arith.constant 4 : i32
      %91 = arith.addi %1, %c4_i32_84 : i32
      %c0_85 = arith.constant 0 : index
      %92 = arith.index_cast %91 : i32 to index
      %c0_86 = arith.constant 0 : index
      %c0_87 = arith.constant 0 : index
      %93 = vector.load %arg2[%c0_85, %92, %c0_86, %c0_87] : memref<1x16x16x4xf32, #tpu.memory_space<vmem>>, vector<1x1x16x4xf32>
      %94 = vector.shape_cast %93 : vector<1x1x16x4xf32> to vector<1x16x4xf32>
      %c5_88 = arith.constant 5 : index
      %c1_89 = arith.constant 1 : index
      %c0_90 = arith.constant 0 : index
      %95 = vector.load %arg8[%c5_88, %c1_89, %c0_90] : memref<6x18x4xf32, #tpu.memory_space<vmem>>, vector<1x16x4xf32>
      tpu.vector_store %arg8[%c5_88, %c1_89, %c0_90], %94 {strides = array<i32>} : memref<6x18x4xf32, #tpu.memory_space<vmem>>, vector<1x16x4xf32>,
    } else {
    }
    %cst_16 = arith.constant 0.000000e+00 : f32
    %22 = vector.broadcast %cst_16 : f32 to vector<64x4xf32>
    %c0_17 = arith.constant 0 : index
    %c0_18 = arith.constant 0 : index
    %c0_19 = arith.constant 0 : index
    %23 = vector.load %arg8[%c0_17, %c0_18, %c0_19] : memref<6x18x4xf32, #tpu.memory_space<vmem>>, vector<4x16x4xf32>
    %24 = vector.shape_cast %23 : vector<4x16x4xf32> to vector<64x4xf32>
    %c0_20 = arith.constant 0 : index
    %c0_21 = arith.constant 0 : index
    %c0_22 = arith.constant 0 : index
    %25 = vector.load %arg3[%c0_20, %c0_21, %c0_22] : memref<9x4x4xf32, #tpu.memory_space<vmem>>, vector<1x4x4xf32>
    %26 = vector.shape_cast %25 : vector<1x4x4xf32> to vector<4x4xf32>
    %cst_23 = arith.constant dense<0.000000e+00> : vector<64x4xf32>
    %27 = tpu.matmul %24, %26, %cst_23 {dimension_numbers = #tpu.dot_dimension_numbers<[1], [0], [0], [1], [0, 0, 1, 1], [], []>} : vector<64x4xf32>, vector<4x4xf32>, vector<64x4xf32> -> vector<64x4xf32>
    %28 = arith.addf %22, %27 : vector<64x4xf32>
    %c0_24 = arith.constant 0 : index
    %c1_25 = arith.constant 1 : index
    %c0_26 = arith.constant 0 : index
    %29 = vector.load %arg8[%c0_24, %c1_25, %c0_26] : memref<6x18x4xf32, #tpu.memory_space<vmem>>, vector<4x16x4xf32>
    %30 = vector.shape_cast %29 : vector<4x16x4xf32> to vector<64x4xf32>
    %c1_27 = arith.constant 1 : index
    %c0_28 = arith.constant 0 : index
    %c0_29 = arith.constant 0 : index
    %31 = vector.load %arg3[%c1_27, %c0_28, %c0_29] : memref<9x4x4xf32, #tpu.memory_space<vmem>>, vector<1x4x4xf32>
    %32 = vector.shape_cast %31 : vector<1x4x4xf32> to vector<4x4xf32>
    %cst_30 = arith.constant dense<0.000000e+00> : vector<64x4xf32>
    %33 = tpu.matmul %30, %32, %cst_30 {dimension_numbers = #tpu.dot_dimension_numbers<[1], [0], [0], [1], [0, 0, 1, 1], [], []>} : vector<64x4xf32>, vector<4x4xf32>, vector<64x4xf32> -> vector<64x4xf32>
    %34 = arith.addf %28, %33 : vector<64x4xf32>
    %c0_31 = arith.constant 0 : index
    %c2 = arith.constant 2 : index
    %c0_32 = arith.constant 0 : index
    %35 = vector.load %arg8[%c0_31, %c2, %c0_32] : memref<6x18x4xf32, #tpu.memory_space<vmem>>, vector<4x16x4xf32>
    %36 = vector.shape_cast %35 : vector<4x16x4xf32> to vector<64x4xf32>
    %c2_33 = arith.constant 2 : index
    %c0_34 = arith.constant 0 : index
    %c0_35 = arith.constant 0 : index
    %37 = vector.load %arg3[%c2_33, %c0_34, %c0_35] : memref<9x4x4xf32, #tpu.memory_space<vmem>>, vector<1x4x4xf32>
    %38 = vector.shape_cast %37 : vector<1x4x4xf32> to vector<4x4xf32>
    %cst_36 = arith.constant dense<0.000000e+00> : vector<64x4xf32>
    %39 = tpu.matmul %36, %38, %cst_36 {dimension_numbers = #tpu.dot_dimension_numbers<[1], [0], [0], [1], [0, 0, 1, 1], [], []>} : vector<64x4xf32>, vector<4x4xf32>, vector<64x4xf32> -> vector<64x4xf32>
    %40 = arith.addf %34, %39 : vector<64x4xf32>
    %c1_37 = arith.constant 1 : index
    %c0_38 = arith.constant 0 : index
    %c0_39 = arith.constant 0 : index
    %41 = vector.load %arg8[%c1_37, %c0_38, %c0_39] : memref<6x18x4xf32, #tpu.memory_space<vmem>>, vector<4x16x4xf32>
    %42 = vector.shape_cast %41 : vector<4x16x4xf32> to vector<64x4xf32>
    %c3 = arith.constant 3 : index
    %c0_40 = arith.constant 0 : index
    %c0_41 = arith.constant 0 : index
    %43 = vector.load %arg3[%c3, %c0_40, %c0_41] : memref<9x4x4xf32, #tpu.memory_space<vmem>>, vector<1x4x4xf32>
    %44 = vector.shape_cast %43 : vector<1x4x4xf32> to vector<4x4xf32>
    %cst_42 = arith.constant dense<0.000000e+00> : vector<64x4xf32>
    %45 = tpu.matmul %42, %44, %cst_42 {dimension_numbers = #tpu.dot_dimension_numbers<[1], [0], [0], [1], [0, 0, 1, 1], [], []>} : vector<64x4xf32>, vector<4x4xf32>, vector<64x4xf32> -> vector<64x4xf32>
    %46 = arith.addf %40, %45 : vector<64x4xf32>
    %c1_43 = arith.constant 1 : index
    %c1_44 = arith.constant 1 : index
    %c0_45 = arith.constant 0 : index
    %47 = vector.load %arg8[%c1_43, %c1_44, %c0_45] : memref<6x18x4xf32, #tpu.memory_space<vmem>>, vector<4x16x4xf32>
    %48 = vector.shape_cast %47 : vector<4x16x4xf32> to vector<64x4xf32>
    %c4 = arith.constant 4 : index
    %c0_46 = arith.constant 0 : index
    %c0_47 = arith.constant 0 : index
    %49 = vector.load %arg3[%c4, %c0_46, %c0_47] : memref<9x4x4xf32, #tpu.memory_space<vmem>>, vector<1x4x4xf32>
    %50 = vector.shape_cast %49 : vector<1x4x4xf32> to vector<4x4xf32>
    %cst_48 = arith.constant dense<0.000000e+00> : vector<64x4xf32>
    %51 = tpu.matmul %48, %50, %cst_48 {dimension_numbers = #tpu.dot_dimension_numbers<[1], [0], [0], [1], [0, 0, 1, 1], [], []>} : vector<64x4xf32>, vector<4x4xf32>, vector<64x4xf32> -> vector<64x4xf32>
    %52 = arith.addf %46, %51 : vector<64x4xf32>
    %c1_49 = arith.constant 1 : index
    %c2_50 = arith.constant 2 : index
    %c0_51 = arith.constant 0 : index
    %53 = vector.load %arg8[%c1_49, %c2_50, %c0_51] : memref<6x18x4xf32, #tpu.memory_space<vmem>>, vector<4x16x4xf32>
    %54 = vector.shape_cast %53 : vector<4x16x4xf32> to vector<64x4xf32>
    %c5 = arith.constant 5 : index
    %c0_52 = arith.constant 0 : index
    %c0_53 = arith.constant 0 : index
    %55 = vector.load %arg3[%c5, %c0_52, %c0_53] : memref<9x4x4xf32, #tpu.memory_space<vmem>>, vector<1x4x4xf32>
    %56 = vector.shape_cast %55 : vector<1x4x4xf32> to vector<4x4xf32>
    %cst_54 = arith.constant dense<0.000000e+00> : vector<64x4xf32>
    %57 = tpu.matmul %54, %56, %cst_54 {dimension_numbers = #tpu.dot_dimension_numbers<[1], [0], [0], [1], [0, 0, 1, 1], [], []>} : vector<64x4xf32>, vector<4x4xf32>, vector<64x4xf32> -> vector<64x4xf32>
    %58 = arith.addf %52, %57 : vector<64x4xf32>
    %c2_55 = arith.constant 2 : index
    %c0_56 = arith.constant 0 : index
    %c0_57 = arith.constant 0 : index
    %59 = vector.load %arg8[%c2_55, %c0_56, %c0_57] : memref<6x18x4xf32, #tpu.memory_space<vmem>>, vector<4x16x4xf32>
    %60 = vector.shape_cast %59 : vector<4x16x4xf32> to vector<64x4xf32>
    %c6 = arith.constant 6 : index
    %c0_58 = arith.constant 0 : index
    %c0_59 = arith.constant 0 : index
    %61 = vector.load %arg3[%c6, %c0_58, %c0_59] : memref<9x4x4xf32, #tpu.memory_space<vmem>>, vector<1x4x4xf32>
    %62 = vector.shape_cast %61 : vector<1x4x4xf32> to vector<4x4xf32>
    %cst_60 = arith.constant dense<0.000000e+00> : vector<64x4xf32>
    %63 = tpu.matmul %60, %62, %cst_60 {dimension_numbers = #tpu.dot_dimension_numbers<[1], [0], [0], [1], [0, 0, 1, 1], [], []>} : vector<64x4xf32>, vector<4x4xf32>, vector<64x4xf32> -> vector<64x4xf32>
    %64 = arith.addf %58, %63 : vector<64x4xf32>
    %c2_61 = arith.constant 2 : index
    %c1_62 = arith.constant 1 : index
    %c0_63 = arith.constant 0 : index
    %65 = vector.load %arg8[%c2_61, %c1_62, %c0_63] : memref<6x18x4xf32, #tpu.memory_space<vmem>>, vector<4x16x4xf32>
    %66 = vector.shape_cast %65 : vector<4x16x4xf32> to vector<64x4xf32>
    %c7 = arith.constant 7 : index
    %c0_64 = arith.constant 0 : index
    %c0_65 = arith.constant 0 : index
    %67 = vector.load %arg3[%c7, %c0_64, %c0_65] : memref<9x4x4xf32, #tpu.memory_space<vmem>>, vector<1x4x4xf32>
    %68 = vector.shape_cast %67 : vector<1x4x4xf32> to vector<4x4xf32>
    %cst_66 = arith.constant dense<0.000000e+00> : vector<64x4xf32>
    %69 = tpu.matmul %66, %68, %cst_66 {dimension_numbers = #tpu.dot_dimension_numbers<[1], [0], [0], [1], [0, 0, 1, 1], [], []>} : vector<64x4xf32>, vector<4x4xf32>, vector<64x4xf32> -> vector<64x4xf32>
    %70 = arith.addf %64, %69 : vector<64x4xf32>
    %c2_67 = arith.constant 2 : index
    %c2_68 = arith.constant 2 : index
    %c0_69 = arith.constant 0 : index
    %71 = vector.load %arg8[%c2_67, %c2_68, %c0_69] : memref<6x18x4xf32, #tpu.memory_space<vmem>>, vector<4x16x4xf32>
    %72 = vector.shape_cast %71 : vector<4x16x4xf32> to vector<64x4xf32>
    %c8 = arith.constant 8 : index
    %c0_70 = arith.constant 0 : index
    %c0_71 = arith.constant 0 : index
    %73 = vector.load %arg3[%c8, %c0_70, %c0_71] : memref<9x4x4xf32, #tpu.memory_space<vmem>>, vector<1x4x4xf32>
    %74 = vector.shape_cast %73 : vector<1x4x4xf32> to vector<4x4xf32>
    %cst_72 = arith.constant dense<0.000000e+00> : vector<64x4xf32>
    %75 = tpu.matmul %72, %74, %cst_72 {dimension_numbers = #tpu.dot_dimension_numbers<[1], [0], [0], [1], [0, 0, 1, 1], [], []>} : vector<64x4xf32>, vector<4x4xf32>, vector<64x4xf32> -> vector<64x4xf32>
    %76 = arith.addf %70, %75 : vector<64x4xf32>
    %77 = vector.shape_cast %76 : vector<64x4xf32> to vector<1x4x16x4xf32>
    %c0_73 = arith.constant 0 : index
    %c0_74 = arith.constant 0 : index
    %c0_75 = arith.constant 0 : index
    %c0_76 = arith.constant 0 : index
    %78 = vector.load %arg6[%c0_73, %c0_74, %c0_75, %c0_76] : memref<1x4x16x4xf32, #tpu.memory_space<vmem>>, vector<1x4x16x4xf32>
    tpu.vector_store %arg6[%c0_73, %c0_74, %c0_75, %c0_76], %77 {strides = array<i32>} : memref<1x4x16x4xf32, #tpu.memory_space<vmem>>, vector<1x4x16x4xf32>,
    %cst_77 = arith.constant dense<0.000000e+00> : vector<4xf32>
    %79 = vector.multi_reduction <add>, %76, %cst_77 [0] : vector<64x4xf32> to vector<4xf32>
    %80 = vector.shape_cast %79 : vector<4xf32> to vector<1x4xf32>
    %cst_78 = arith.constant 1.562500e-02 : f32
    %81 = vector.broadcast %cst_78 : f32 to vector<1x4xf32>
    %82 = arith.mulf %80, %81 : vector<1x4xf32>
    %83 = vector.broadcast %82 : vector<1x4xf32> to vector<64x4xf32>
    %84 = arith.subf %76, %83 : vector<64x4xf32>
    %85 = arith.mulf %84, %84 : vector<64x4xf32>
    %cst_79 = arith.constant dense<0.000000e+00> : vector<4xf32>
    %86 = vector.multi_reduction <add>, %85, %cst_79 [0] : vector<64x4xf32> to vector<4xf32>
    %87 = vector.shape_cast %86 : vector<4xf32> to vector<1x4xf32>
    %88 = tpu.concatenate %80, %87 in 0 : vector<1x4xf32>, vector<1x4xf32> -> vector<2x4xf32>
    %89 = vector.shape_cast %88 : vector<2x4xf32> to vector<1x1x2x4xf32>
    %c0_80 = arith.constant 0 : index
    %c0_81 = arith.constant 0 : index
    %c0_82 = arith.constant 0 : index
    %c0_83 = arith.constant 0 : index
    %90 = vector.load %arg7[%c0_80, %c0_81, %c0_82, %c0_83] : memref<1x1x2x4xf32, #tpu.memory_space<vmem>>, vector<1x1x2x4xf32>
    tpu.vector_store %arg7[%c0_80, %c0_81, %c0_82, %c0_83], %89 {strides = array<i32>} : memref<1x1x2x4xf32, #tpu.memory_space<vmem>>, vector<1x1x2x4xf32>,
    return
  }
  func.func @transform_0(%arg0: i32, %arg1: i32) -> (i32, i32, i32, i32) {
    %c0_i32 = arith.constant 0 : i32
    %c0_i32_0 = arith.constant 0 : i32
    %c0_i32_1 = arith.constant 0 : i32
    %c0_i32_2 = arith.constant 0 : i32
    return %arg0, %c0_i32, %c0_i32_0, %c0_i32_1 : i32, i32, i32, i32
  }
  func.func @transform_1(%arg0: i32, %arg1: i32) -> (i32, i32, i32) {
    %c0_i32 = arith.constant 0 : i32
    %c0_i32_0 = arith.constant 0 : i32
    %c0_i32_1 = arith.constant 0 : i32
    %c0_i32_2 = arith.constant 0 : i32
    return %c0_i32, %c0_i32_0, %c0_i32_1 : i32, i32, i32
  }
  func.func @transform_2(%arg0: i32, %arg1: i32) -> (i32, i32) {
    %c0_i32 = arith.constant 0 : i32
    %c0_i32_0 = arith.constant 0 : i32
    %c0_i32_1 = arith.constant 0 : i32
    return %c0_i32, %c0_i32_0 : i32, i32
  }
  func.func @transform_3(%arg0: i32, %arg1: i32) -> (i32, i32) {
    %c0_i32 = arith.constant 0 : i32
    %c0_i32_0 = arith.constant 0 : i32
    %c0_i32_1 = arith.constant 0 : i32
    return %c0_i32, %c0_i32_0 : i32, i32
  }
  func.func @transform_4(%arg0: i32, %arg1: i32) -> (i32, i32, i32, i32) {
    %c0_i32 = arith.constant 0 : i32
    %c0_i32_0 = arith.constant 0 : i32
    %c0_i32_1 = arith.constant 0 : i32
    return %arg0, %arg1, %c0_i32, %c0_i32_0 : i32, i32, i32, i32
  }
  func.func @transform_5(%arg0: i32, %arg1: i32) -> (i32, i32, i32, i32) {
    %c0_i32 = arith.constant 0 : i32
    %c0_i32_0 = arith.constant 0 : i32
    %c0_i32_1 = arith.constant 0 : i32
    return %arg0, %arg1, %c0_i32, %c0_i32_0 : i32, i32, i32, i32
  }
}

</mosaic_0001>

<llo_original>
// kernel: tpu_custom_call.1
$region0: #{tpu_custom_call.1}
  #allocation0 [shape = 'u32[]', space=smem, size = 0x4, offset = 0x4, fixed_abs, tag = 'smem constant byte address 0x4 - core index']
  #allocation1 [shape = 'u32[144,128]{1,0:T(1,128)}', space=vmem, size = 0x12000, scoped, tag = 'internal scratch']
  #allocation2 [shape = 'f32[6,18,4]{2,1,0:T(8,128)}', space=vmem, size = 0x12000, scoped, tag = 'scratch operand']
  %s0 = inlined_call_operand.vmem [shape: f32[2,16,16,4], index: 0, kind: input, shape index: {}]
  %s1 = inlined_call_operand.vmem [shape: f32[9,4,4], index: 1, kind: input, shape index: {}]
  %s2 = inlined_call_operand.vmem [shape: f32[1,4], index: 2, kind: input, shape index: {}]
  %s3 = inlined_call_operand.vmem [shape: f32[1,4], index: 3, kind: input, shape index: {}]
  %s4 = inlined_call_operand.vmem [shape: f32[2,16,16,4], index: 4, kind: output, shape index: {0}]
  %s5 = inlined_call_operand.hbm [shape: f32[2,4,2,4], index: 5, kind: output, shape index: {1}]
  %6 = xla_tuple %s4, %s5
  %s7 = sld [smem:[#allocation0]]
  $region73: #{tpu_custom_call.1} parent=0
    _
  %s9 = ssub.s32 1, %s7
  %s10 = scalar_select 0, %s9, %s7
  $region1: #{tpu_custom_call.1} parent=0
    #allocation3 [shape = 'u8[2048]{0}', space=vmem, size = 0x800, scoped, tag = 'output window, operand 1']
    #allocation4 [shape = 's32[2]{0}', space=sflag, size = 0x8, scoped, tag = 'scoped memory for tpu_custom_call.1']
    %11 = vsyncpa [#allocation4], 0
    %s12 = scalar_lea.sflag [#allocation4], 1
    %13 = vsyncpa %s12, 0
    loop: start=0, step=1, limit=10
    $region2: #{tpu_custom_call.1} parent=1 // loop_pre_header
      _
    $region3: #{tpu_custom_call.1} parent=1 // loop_header
      %s15 = sphi 0, %s19
      %p16 = scmp.ge.s32.totalorder %s15, 10
      %s22 = sphi 0, %s34
      %s23 = sphi 0, %s30
      %s24 = sphi 0, %s22
      %s25 = sphi 0, %s23
      %s26 = sphi 0, %s24
      %s27 = sphi 0, %s25
      %s37 = sphi 0, %s39
      %s40 = sphi 0, %s37
      %s41 = sphi 0, %s40
      %s57 = sphi 0, %s41
      %s61 = sphi 0, %s61
      %s63 = sphi 0, %s61
      %s64 = sphi 0, %s63
      %s78 = sphi 0, %s64
      %s82 = sphi 0, %s82
      %s84 = sphi 0, %s82
      %s85 = sphi 0, %s84
      %s99 = sphi 0, %s85
      %s103 = sphi 0, %s103
      %s105 = sphi 0, %s103
      %s106 = sphi 0, %s105
      %s120 = sphi 0, %s106
      %s128 = sphi 0, %s130
      %s131 = sphi 0, %s128
      %s132 = sphi 0, %s131
      %s148 = sphi 0, %s132
      %s156 = sphi 0, %s158
      %s159 = sphi 0, %s156
      %s160 = sphi 0, %s159
      %s176 = sphi 0, %s160
    $region4: #{tpu_custom_call.1} parent=1 // loop_header_branch
      %18 = sbr.rel (%p16) target = $region8
    $region5: #{tpu_custom_call.1} parent=1 // loop_body
      %s20 = ssub.s32 %s15, 1
      %s21 = ssub.s32 %s15, 2
      %s28 = sadd.s32 1, %s23
      %p29 = scmp.ge.s32.totalorder %s28, 4
      %s30 = scalar_select %p29, 0, %s28
      %s31 = sadd.s32 1, %s22
      %s32 = scalar_select %p29, %s31, %s22
      %p33 = scmp.ge.s32.totalorder %s32, 2
      %s34 = scalar_select %p33, 0, %s32
      %s35 = ssub.s32 %s22, %s34
      %p36 = scmp.eq.s32.totalorder %s35, 0
      %s38 = sadd.s32 %s37, 1
      %s39 = scalar_select %p36, %s37, %s38
      %p42 = pneg %p36
      %p43 = scmp.eq.s32.totalorder %s15, 7
      %p44 = por %p42, %p43
      %p45 = scmp.ne.s32.totalorder %s37, %s40
      %p46 = scmp.eq.s32.totalorder %s15, 0
      %p47 = por %p45, %p46
      %p48 = scmp.ne.s32.totalorder %s37, %s40
      %p49 = scmp.eq.s32.totalorder %s20, 7
      %p50 = por %p48, %p49
      %p51 = scmp.ne.s32.totalorder %s40, %s41
      %p52 = scmp.eq.s32.totalorder %s20, 0
      %p53 = por %p51, %p52
      %p54 = scmp.ne.s32.totalorder %s40, %s41
      %p55 = scmp.eq.s32.totalorder %s21, 7
      %p56 = por %p54, %p55
      %p58 = scmp.ne.s32.totalorder %s41, %s57
      %p59 = scmp.eq.s32.totalorder %s21, 0
      %p60 = por %p58, %p59
      %s62 = sadd.s32 %s61, 1
      %p65 = scmp.eq.s32.totalorder %s15, 7
      %p66 = scmp.ne.s32.totalorder %s61, %s63
      %p67 = scmp.eq.s32.totalorder %s15, 0
      %p68 = por %p66, %p67
      %p69 = scmp.ne.s32.totalorder %s61, %s63
      %p70 = scmp.eq.s32.totalorder %s20, 7
      %p71 = por %p69, %p70
      %p72 = scmp.ne.s32.totalorder %s63, %s64
      %p73 = scmp.eq.s32.totalorder %s20, 0
      %p74 = por %p72, %p73
      %p75 = scmp.ne.s32.totalorder %s63, %s64
      %p76 = scmp.eq.s32.totalorder %s21, 7
      %p77 = por %p75, %p76
      %p79 = scmp.ne.s32.totalorder %s64, %s78
      %p80 = scmp.eq.s32.totalorder %s21, 0
      %p81 = por %p79, %p80
      %s83 = sadd.s32 %s82, 1
      %p86 = scmp.eq.s32.totalorder %s15, 7
      %p87 = scmp.ne.s32.totalorder %s82, %s84
      %p88 = scmp.eq.s32.totalorder %s15, 0
      %p89 = por %p87, %p88
      %p90 = scmp.ne.s32.totalorder %s82, %s84
      %p91 = scmp.eq.s32.totalorder %s20, 7
      %p92 = por %p90, %p91
      %p93 = scmp.ne.s32.totalorder %s84, %s85
      %p94 = scmp.eq.s32.totalorder %s20, 0
      %p95 = por %p93, %p94
      %p96 = scmp.ne.s32.totalorder %s84, %s85
      %p97 = scmp.eq.s32.totalorder %s21, 7
      %p98 = por %p96, %p97
      %p100 = scmp.ne.s32.totalorder %s85, %s99
      %p101 = scmp.eq.s32.totalorder %s21, 0
      %p102 = por %p100, %p101
      %s104 = sadd.s32 %s103, 1
      %p107 = scmp.eq.s32.totalorder %s15, 7
      %p108 = scmp.ne.s32.totalorder %s103, %s105
      %p109 = scmp.eq.s32.totalorder %s15, 0
      %p110 = por %p108, %p109
      %p111 = scmp.ne.s32.totalorder %s103, %s105
      %p112 = scmp.eq.s32.totalorder %s20, 7
      %p113 = por %p111, %p112
      %p114 = scmp.ne.s32.totalorder %s105, %s106
      %p115 = scmp.eq.s32.totalorder %s20, 0
      %p116 = por %p114, %p115
      %p117 = scmp.ne.s32.totalorder %s105, %s106
      %p118 = scmp.eq.s32.totalorder %s21, 7
      %p119 = por %p117, %p118
      %p121 = scmp.ne.s32.totalorder %s106, %s120
      %p122 = scmp.eq.s32.totalorder %s21, 0
      %p123 = por %p121, %p122
      %s124 = ssub.s32 %s22, %s34
      %s125 = ssub.s32 %s23, %s30
      %s126 = sor.u32 %s124, %s125
      %p127 = scmp.eq.s32.totalorder %s126, 0
      %s129 = sadd.s32 %s128, 1
      %s130 = scalar_select %p127, %s128, %s129
      %p133 = pneg %p127
      %p134 = scmp.eq.s32.totalorder %s15, 7
      %p135 = por %p133, %p134
      %p136 = scmp.ne.s32.totalorder %s128, %s131
      %p137 = scmp.eq.s32.totalorder %s15, 0
      %p138 = por %p136, %p137
      %p139 = scmp.ne.s32.totalorder %s128, %s131
      %p140 = scmp.eq.s32.totalorder %s20, 7
      %p141 = por %p139, %p140
      %p142 = scmp.ne.s32.totalorder %s131, %s132
      %p143 = scmp.eq.s32.totalorder %s20, 0
      %p144 = por %p142, %p143
      %p145 = scmp.ne.s32.totalorder %s131, %s132
      %p146 = scmp.eq.s32.totalorder %s21, 7
      %p147 = por %p145, %p146
      %p149 = scmp.ne.s32.totalorder %s132, %s148
      %p150 = scmp.eq.s32.totalorder %s21, 0
      %p151 = por %p149, %p150
      %s152 = ssub.s32 %s22, %s34
      %s153 = ssub.s32 %s23, %s30
      %s154 = sor.u32 %s152, %s153
      %p155 = scmp.eq.s32.totalorder %s154, 0
      %s157 = sadd.s32 %s156, 1
      %s158 = scalar_select %p155, %s156, %s157
      %p161 = pneg %p155
      %p162 = scmp.eq.s32.totalorder %s15, 7
      %p163 = por %p161, %p162
      %p164 = scmp.ne.s32.totalorder %s156, %s159
      %p165 = scmp.eq.s32.totalorder %s15, 0
      %p166 = por %p164, %p165
      %p167 = scmp.ne.s32.totalorder %s156, %s159
      %p168 = scmp.eq.s32.totalorder %s20, 7
      %p169 = por %p167, %p168
      %p170 = scmp.ne.s32.totalorder %s159, %s160
      %p171 = scmp.eq.s32.totalorder %s20, 0
      %p172 = por %p170, %p171
      %p173 = scmp.ne.s32.totalorder %s159, %s160
      %p174 = scmp.eq.s32.totalorder %s21, 7
      %p175 = por %p173, %p174
      %p177 = scmp.ne.s32.totalorder %s160, %s176
      %p178 = scmp.eq.s32.totalorder %s21, 0
      %p179 = por %p177, %p178
      %p180 = scmp.le.s32.totalorder 1, %s15
      %p181 = scmp.lt.s32.totalorder %s15, 9
      %p182 = pnand %p180, %p181
      %p183 = pneg %p182
      // Predicated region
      $region9: #{tpu_custom_call.1} parent=5 // pred_check
        _
      $region10: #{tpu_custom_call.1} parent=5 // pred_check_branch
        %185 = sbr.rel (%p182) target = $region12
      $region11: #{tpu_custom_call.1} parent=5 // pred_region
        %s186 = ssub.s32 %s15, 1
        // Predicated region
        $region13: #{tpu_custom_call.1} parent=11 // pred_check
          %p187 = pneg %p74
        $region14: #{tpu_custom_call.1} parent=11 // pred_check_branch
          %189 = sbr.rel (%p187) target = $region16
        $region15: #{tpu_custom_call.1} parent=11 // pred_region
          _
        $region16: #{tpu_custom_call.1} parent=11 // pred_fallthru
          _
        // Predicated region
        $region17: #{tpu_custom_call.1} parent=11 // pred_check
          %p190 = pneg %p95
        $region18: #{tpu_custom_call.1} parent=11 // pred_check_branch
          %192 = sbr.rel (%p190) target = $region20
        $region19: #{tpu_custom_call.1} parent=11 // pred_region
          _
        $region20: #{tpu_custom_call.1} parent=11 // pred_fallthru
          _
        // Predicated region
        $region21: #{tpu_custom_call.1} parent=11 // pred_check
          %p193 = pneg %p116
        $region22: #{tpu_custom_call.1} parent=11 // pred_check_branch
          %195 = sbr.rel (%p193) target = $region24
        $region23: #{tpu_custom_call.1} parent=11 // pred_region
          _
        $region24: #{tpu_custom_call.1} parent=11 // pred_fallthru
          _
      $region12: #{tpu_custom_call.1} parent=5 // pred_fallthru
        _
      %p196 = scmp.lt.s32.totalorder %s15, 8
      // Predicated region
      $region25: #{tpu_custom_call.1} parent=5 // pred_check
        %p197 = pneg %p196
      $region26: #{tpu_custom_call.1} parent=5 // pred_check_branch
        %199 = sbr.rel (%p197) target = $region28
      $region27: #{tpu_custom_call.1} parent=5 // pred_region
        // Predicated region
        $region29: #{tpu_custom_call.1} parent=27 // pred_check
          %p200 = pneg %p47
        $region30: #{tpu_custom_call.1} parent=27 // pred_check_branch
          %202 = sbr.rel (%p200) target = $region32
        $region31: #{tpu_custom_call.1} parent=27 // pred_region
          %p203 = scmp.lt.s32.totalorder %s22, 1
          %s204 = scalar_select %p203, %s22, 1
          %s205 = smul.addr %s204, 32
          %s206 = smul.addr %s205, 8
          %s207 = scalar_lea.vmem %s0, %s206
        $region32: #{tpu_custom_call.1} parent=27 // pred_fallthru
          _
      $region28: #{tpu_custom_call.1} parent=5 // pred_fallthru
        _
      %p208 = scmp.le.s32.totalorder 1, %s15
      %p209 = scmp.lt.s32.totalorder %s15, 9
      %p210 = pnand %p208, %p209
      %p211 = pneg %p210
      // Predicated region
      $region33: #{tpu_custom_call.1} parent=5 // pred_check
        _
      $region34: #{tpu_custom_call.1} parent=5 // pred_check_branch
        %213 = sbr.rel (%p210) target = $region36
      $region35: #{tpu_custom_call.1} parent=5 // pred_region
        %s214 = ssub.s32 %s15, 1
        %p215 = scmp.lt.s32.totalorder %s24, 1
        %s216 = scalar_select %p215, %s24, 1
        %s217 = smul.addr %s216, 32
        %s218 = smul.addr %s217, 8
        %s219 = scalar_lea.vmem %s0, %s218
        %p220 = pneg %p53
        %p221 = pneg %p50
        %p222 = pneg %p74
        %p223 = pneg %p71
        %p224 = pneg %p95
        %p225 = pneg %p92
        %p226 = pneg %p116
        %p227 = pneg %p113
        %p228 = pneg %p144
        %p229 = pneg %p141
        %s230 = smul.u32 4, %s25
        %p231 = scmp.lt.s32.totalorder %s24, 1
        %s232 = scalar_select %p231, %s24, 1
        %p233 = scmp.lt.s32.totalorder %s230, 15
        %s234 = scalar_select %p233, %s230, 15
        %s235 = smul.addr %s234, 2
        %s236 = smul.addr %s232, 32
        %s237 = sadd.s32 %s235, %s236
        %s238 = smul.addr %s237, 8
        %s239 = scalar_lea.vmem %s4, %s238
        %p240 = pneg %p172
        %p241 = pneg %p169
        %s242 = sand.u32 %s159, 1
        %s243 = scalar_lea.sflag [#allocation4], %s242
        %s244 = sand.u32 %s159, 1
        %s245 = smul.addr %s244, 2
        %s246 = scalar_lea.vmem [#allocation3], %s245
        %p247 = scmp.lt.s32.totalorder %s24, 1
        %s248 = scalar_select %p247, %s24, 1
        %s249 = smul.addr %s248, 32
        %s250 = smul.addr %s249, 8
        %s251 = scalar_lea.vmem %s0, %s250
        %s252 = smul.u32 4, %s25
        %p253 = scmp.lt.s32.totalorder %s24, 1
        %s254 = scalar_select %p253, %s24, 1
        %p255 = scmp.lt.s32.totalorder %s252, 15
        %s256 = scalar_select %p255, %s252, 15
        %s257 = smul.addr %s256, 2
        %s258 = smul.addr %s254, 32
        %s259 = sadd.s32 %s257, %s258
        %s260 = smul.addr %s259, 8
        %s261 = scalar_lea.vmem %s4, %s260
        %s262 = smul.u32 4, %s25
        %s263 = smul.u32 %s25, 4
        %vm264 = vcmask 24576
        %265 = vst.msk [vmem:[#allocation2] sm:$0x1] %vm264, 0.0
        %266 = vst.msk [vmem:[#allocation2 + $0x18] sm:$0x1] %vm264, 0.0
        %267 = vst.msk [vmem:[#allocation2 + $0x30] sm:$0x1] %vm264, 0.0
        %268 = vst.msk [vmem:[#allocation2 + $0x48] sm:$0x1] %vm264, 0.0
        %269 = vst.msk [vmem:[#allocation2 + $0x60] sm:$0x1] %vm264, 0.0
        %270 = vst.msk [vmem:[#allocation2 + $0x78] sm:$0x1] %vm264, 0.0
        %271 = vst.msk [vmem:[#allocation2 + $0x11] sm:$0x1] %vm264, 0.0
        %272 = vst.msk [vmem:[#allocation2 + $0x29] sm:$0x1] %vm264, 0.0
        %273 = vst.msk [vmem:[#allocation2 + $0x41] sm:$0x1] %vm264, 0.0
        %274 = vst.msk [vmem:[#allocation2 + $0x59] sm:$0x1] %vm264, 0.0
        %275 = vst.msk [vmem:[#allocation2 + $0x71] sm:$0x1] %vm264, 0.0
        %276 = vst.msk [vmem:[#allocation2 + $0x89] sm:$0x1] %vm264, 0.0
        %s277 = smul.u32 %s263, 16
        %s278 = scalar_lea.vmem %s251, %s277
        %v279 = vld [vmem:[%s278] sm:$0xff]
        %v280 = vld [vmem:[%s278 + $0x8] sm:$0xff]
        %v281 = vld [vmem:[%s278 + $0x10] sm:$0xff]
        %v282 = vld [vmem:[%s278 + $0x18] sm:$0xff]
        %v283 = vld [vmem:[%s278 + $0x20] sm:$0xff]
        %v284 = vld [vmem:[%s278 + $0x28] sm:$0xff]
        %v285 = vld [vmem:[%s278 + $0x30] sm:$0xff]
        %v286 = vld [vmem:[%s278 + $0x38] sm:$0xff]
        %s287 = scalar_lea.vmem [#allocation2], 24
        %vm288 = vcmask 31744
        %289 = vst.msk [vmem:[%s287 + $0x1] sm:$0xff] %vm288, %v279
        %290 = vst.msk [vmem:[%s287 + $0x9] sm:$0xff] %vm288, %v280
        %291 = vst.msk [vmem:[%s287 + $0x19] sm:$0xff] %vm288, %v281
        %292 = vst.msk [vmem:[%s287 + $0x21] sm:$0xff] %vm288, %v282
        %293 = vst.msk [vmem:[%s287 + $0x31] sm:$0xff] %vm288, %v283
        %294 = vst.msk [vmem:[%s287 + $0x39] sm:$0xff] %vm288, %v284
        %295 = vst.msk [vmem:[%s287 + $0x49] sm:$0xff] %vm288, %v285
        %296 = vst.msk [vmem:[%s287 + $0x51] sm:$0xff] %vm288, %v286
        %p297 = scmp.eq.s32.totalorder %s25, 0
        // Predicated region
        $region37: #{tpu_custom_call.1} parent=35 // pred_check
          %p298 = pneg %p297
        $region38: #{tpu_custom_call.1} parent=35 // pred_check_branch
          %300 = sbr.rel (%p298) target = $region40
        $region39: #{tpu_custom_call.1} parent=35 // pred_region
          %301 = vst.msk [vmem:[#allocation2 + $0x1] sm:$0xff] %vm288, 0.0
          %302 = vst.msk [vmem:[#allocation2 + $0x9] sm:$0xff] %vm288, 0.0
        $region40: #{tpu_custom_call.1} parent=35 // pred_fallthru
          _
        %p303 = scmp.gt.s32.totalorder %s25, 0
        // Predicated region
        $region41: #{tpu_custom_call.1} parent=35 // pred_check
          %p304 = pneg %p303
        $region42: #{tpu_custom_call.1} parent=35 // pred_check_branch
          %306 = sbr.rel (%p304) target = $region44
        $region43: #{tpu_custom_call.1} parent=35 // pred_region
          %s307 = ssub.s32 %s263, 1
          %s308 = smul.u32 %s307, 16
          %s309 = scalar_lea.vmem %s251, %s308
          %v310 = vld [vmem:[%s309] sm:$0xff]
          %v311 = vld [vmem:[%s309 + $0x8] sm:$0xff]
          %312 = vst.msk [vmem:[#allocation2 + $0x1] sm:$0xff] %vm288, %v310
          %313 = vst.msk [vmem:[#allocation2 + $0x9] sm:$0xff] %vm288, %v311
        $region44: #{tpu_custom_call.1} parent=35 // pred_fallthru
          _
        %p314 = scmp.eq.s32.totalorder %s25, 3
        // Predicated region
        $region45: #{tpu_custom_call.1} parent=35 // pred_check
          %p315 = pneg %p314
        $region46: #{tpu_custom_call.1} parent=35 // pred_check_branch
          %317 = sbr.rel (%p315) target = $region48
        $region47: #{tpu_custom_call.1} parent=35 // pred_region
          %s318 = scalar_lea.vmem [#allocation2], 120
          %319 = vst.msk [vmem:[%s318 + $0x1] sm:$0xff] %vm288, 0.0
          %320 = vst.msk [vmem:[%s318 + $0x9] sm:$0xff] %vm288, 0.0
        $region48: #{tpu_custom_call.1} parent=35 // pred_fallthru
          _
        %p321 = scmp.lt.s32.totalorder %s25, 3
        // Predicated region
        $region49: #{tpu_custom_call.1} parent=35 // pred_check
          %p322 = pneg %p321
        $region50: #{tpu_custom_call.1} parent=35 // pred_check_branch
          %324 = sbr.rel (%p322) target = $region52
        $region51: #{tpu_custom_call.1} parent=35 // pred_region
          %s325 = sadd.s32 %s263, 4
          %s326 = smul.u32 %s325, 16
          %s327 = scalar_lea.vmem %s251, %s326
          %v328 = vld [vmem:[%s327] sm:$0xff]
          %v329 = vld [vmem:[%s327 + $0x8] sm:$0xff]
          %s330 = scalar_lea.vmem [#allocation2], 120
          %331 = vst.msk [vmem:[%s330 + $0x1] sm:$0xff] %vm288, %v328
          %332 = vst.msk [vmem:[%s330 + $0x9] sm:$0xff] %vm288, %v329
        $region52: #{tpu_custom_call.1} parent=35 // pred_fallthru
          _
        %v333 = vld [vmem:[#allocation2] sm:$0xff]
        %v334 = vld [vmem:[#allocation2 + $0x8] sm:$0xff]
        %v335 = vld [vmem:[#allocation2 + $0x18] sm:$0xff]
        %v336 = vld [vmem:[#allocation2 + $0x20] sm:$0xff]
        %v337 = vld [vmem:[#allocation2 + $0x30] sm:$0xff]
        %v338 = vld [vmem:[#allocation2 + $0x38] sm:$0xff]
        %v339 = vld [vmem:[#allocation2 + $0x48] sm:$0xff]
        %v340 = vld [vmem:[#allocation2 + $0x50] sm:$0xff]
        %v341 = vld [vmem:[%s1] sm:$0xf]
        %v342 = vld [vmem:[#allocation2 + $0x1] sm:$0xff]
        %v343 = vld [vmem:[#allocation2 + $0x9] sm:$0xff]
        %v344 = vld [vmem:[#allocation2 + $0x19] sm:$0xff]
        %v345 = vld [vmem:[#allocation2 + $0x21] sm:$0xff]
        %v346 = vld [vmem:[#allocation2 + $0x31] sm:$0xff]
        %v347 = vld [vmem:[#allocation2 + $0x39] sm:$0xff]
        %v348 = vld [vmem:[#allocation2 + $0x49] sm:$0xff]
        %v349 = vld [vmem:[#allocation2 + $0x51] sm:$0xff]
        %s350 = scalar_lea.vmem %s1, 4
        %v351 = vld [vmem:[%s350] sm:$0xf]
        %v353 = vsel %vm288, %v342, 0
        %v356 = vsel %vm288, %v343, 0
        %v359 = vsel %vm288, %v344, 0
        %v362 = vsel %vm288, %v345, 0
        %v365 = vsel %vm288, %v346, 0
        %v368 = vsel %vm288, %v347, 0
        %v371 = vsel %vm288, %v348, 0
        %v374 = vsel %vm288, %v349, 0
        %vm376 = vcmask 1043456
        %v378 = vsel %vm376, %v351, 0
        %380 = vmatprep.subr.mxu0 0.0
        %381 = vmatpush1.msra.mxu0 %v378
        %382 = vmatprep.subr.mxu0 0.0
        %383 = vmatpush1.msra.mxu0 0.0
        %384 = vmatprep.subr.mxu0 0.0
        %385 = vmatpush1.msra.mxu0 0.0
        %386 = vmatprep.subr.mxu0 0.0
        %387 = vmatpush1.msra.mxu0 0.0
        %388 = vmatprep.subr.mxu0 0.0
        %389 = vmatpush1.msra.mxu0 0.0
        %390 = vmatprep.subr.mxu0 0.0
        %391 = vmatpush1.msra.mxu0 0.0
        %392 = vmatprep.subr.mxu0 0.0
        %393 = vmatpush1.msra.mxu0 0.0
        %394 = vmatprep.subr.mxu0 0.0
        %395 = vmatpush1.msra.mxu0 0.0
        %396 = vmatprep.subr.mxu0 0.0
        %397 = vmatpush1.msra.mxu0 0.0
        %398 = vmatprep.subr.mxu0 0.0
        %399 = vmatpush1.msra.mxu0 0.0
        %400 = vmatprep.subr.mxu0 0.0
        %401 = vmatpush1.msra.mxu0 0.0
        %402 = vmatprep.subr.mxu0 0.0
        %403 = vmatpush1.msra.mxu0 0.0
        %404 = vmatprep.subr.mxu0 0.0
        %405 = vmatpush1.msra.mxu0 0.0
        %406 = vmatprep.subr.mxu0 0.0
        %407 = vmatpush1.msra.mxu0 0.0
        %408 = vmatprep.subr.mxu0 0.0
        %409 = vmatpush1.msra.mxu0 0.0
        %410 = vmatprep.subr.mxu0 0.0
        %411 = vmatpush1.msra.mxu0 0.0
        %412 = vmatprep.subr.mxu0 0.0
        %413 = vmatpush1.msra.mxu0 0.0
        %414 = vmatprep.subr.mxu0 0.0
        %415 = vmatpush1.msra.mxu0 0.0
        %416 = vmatprep.subr.mxu0 0.0
        %417 = vmatpush1.msra.mxu0 0.0
        %418 = vmatprep.subr.mxu0 0.0
        %419 = vmatpush1.msra.mxu0 0.0
        %420 = vmatprep.subr.mxu0 0.0
        %421 = vmatpush1.msra.mxu0 0.0
        %422 = vmatprep.subr.mxu0 0.0
        %423 = vmatpush1.msra.mxu0 0.0
        %424 = vmatprep.subr.mxu0 0.0
        %425 = vmatpush1.msra.mxu0 0.0
        %426 = vmatprep.subr.mxu0 0.0
        %427 = vmatpush1.msra.mxu0 0.0
        %428 = vmatprep.subr.mxu0 0.0
        %429 = vmatpush1.msra.mxu0 0.0
        %430 = vmatprep.subr.mxu0 0.0
        %431 = vmatpush1.msra.mxu0 0.0
        %432 = vmatprep.subr.mxu0 0.0
        %433 = vmatpush1.msra.mxu0 0.0
        %434 = vmatprep.subr.mxu0 0.0
        %435 = vmatpush1.msra.mxu0 0.0
        %436 = vmatprep.subr.mxu0 0.0
        %437 = vmatpush1.msra.mxu0 0.0
        %438 = vmatprep.subr.mxu0 0.0
        %439 = vmatpush1.msra.mxu0 0.0
        %440 = vmatprep.subr.mxu0 0.0
        %441 = vmatpush1.msra.mxu0 0.0
        %442 = vmatprep.subr.mxu0 0.0
        %443 = vmatpush1.msra.mxu0 0.0
        %444 = vmatprep.mubr.f32.mxu0 0.0
        %445 = vmatmul.mubr.f32.gmra.mrb[0].mxu0 %v353
        %v446 = vpop.f32.mrb[0].mxu0
        %v447 = vadd.f32 0.0, %v446
        %v448 = vpop.f32.mrb[0].mxu0
        %449 = vmatprep.mubr.f32.mxu0 0.0
        %450 = vmatmul.mubr.f32.gmra.mrb[0].mxu0 %v356
        %v451 = vpop.f32.mrb[0].mxu0
        %v452 = vadd.f32 0.0, %v451
        %v453 = vpop.f32.mrb[0].mxu0
        %454 = vmatprep.mubr.f32.mxu0 0.0
        %455 = vmatmul.mubr.f32.gmra.mrb[0].mxu0 %v359
        %v456 = vpop.f32.mrb[0].mxu0
        %v457 = vadd.f32 0.0, %v456
        %v458 = vpop.f32.mrb[0].mxu0
        %459 = vmatprep.mubr.f32.mxu0 0.0
        %460 = vmatmul.mubr.f32.gmra.mrb[0].mxu0 %v362
        %v461 = vpop.f32.mrb[0].mxu0
        %v462 = vadd.f32 0.0, %v461
        %v463 = vpop.f32.mrb[0].mxu0
        %464 = vmatprep.mubr.f32.mxu0 0.0
        %465 = vmatmul.mubr.f32.gmra.mrb[0].mxu0 %v365
        %v466 = vpop.f32.mrb[0].mxu0
        %v467 = vadd.f32 0.0, %v466
        %v468 = vpop.f32.mrb[0].mxu0
        %469 = vmatprep.mubr.f32.mxu0 0.0
        %470 = vmatmul.mubr.f32.gmra.mrb[0].mxu0 %v368
        %v471 = vpop.f32.mrb[0].mxu0
        %v472 = vadd.f32 0.0, %v471
        %v473 = vpop.f32.mrb[0].mxu0
        %474 = vmatprep.mubr.f32.mxu0 0.0
        %475 = vmatmul.mubr.f32.gmra.mrb[0].mxu0 %v371
        %v476 = vpop.f32.mrb[0].mxu0
        %v477 = vadd.f32 0.0, %v476
        %v478 = vpop.f32.mrb[0].mxu0
        %479 = vmatprep.mubr.f32.mxu0 0.0
        %480 = vmatmul.mubr.f32.gmra.mrb[0].mxu0 %v374
        %v481 = vpop.f32.mrb[0].mxu0
        %v482 = vadd.f32 0.0, %v481
        %v483 = vpop.f32.mrb[0].mxu0
        %484 = vdwg.mxu0
        %v486 = vsel %vm288, %v333, 0
        %v489 = vsel %vm288, %v334, 0
        %v492 = vsel %vm288, %v335, 0
        %v495 = vsel %vm288, %v336, 0
        %v498 = vsel %vm288, %v337, 0
        %v501 = vsel %vm288, %v338, 0
        %v504 = vsel %vm288, %v339, 0
        %v507 = vsel %vm288, %v340, 0
        %v510 = vsel %vm376, %v341, 0
        %512 = vmatprep.subr.mxu0 0.0
        %513 = vmatpush1.msra.mxu0 %v510
        %514 = vmatprep.subr.mxu0 0.0
        %515 = vmatpush1.msra.mxu0 0.0
        %516 = vmatprep.subr.mxu0 0.0
        %517 = vmatpush1.msra.mxu0 0.0
        %518 = vmatprep.subr.mxu0 0.0
        %519 = vmatpush1.msra.mxu0 0.0
        %520 = vmatprep.subr.mxu0 0.0
        %521 = vmatpush1.msra.mxu0 0.0
        %522 = vmatprep.subr.mxu0 0.0
        %523 = vmatpush1.msra.mxu0 0.0
        %524 = vmatprep.subr.mxu0 0.0
        %525 = vmatpush1.msra.mxu0 0.0
        %526 = vmatprep.subr.mxu0 0.0
        %527 = vmatpush1.msra.mxu0 0.0
        %528 = vmatprep.subr.mxu0 0.0
        %529 = vmatpush1.msra.mxu0 0.0
        %530 = vmatprep.subr.mxu0 0.0
        %531 = vmatpush1.msra.mxu0 0.0
        %532 = vmatprep.subr.mxu0 0.0
        %533 = vmatpush1.msra.mxu0 0.0
        %534 = vmatprep.subr.mxu0 0.0
        %535 = vmatpush1.msra.mxu0 0.0
        %536 = vmatprep.subr.mxu0 0.0
        %537 = vmatpush1.msra.mxu0 0.0
        %538 = vmatprep.subr.mxu0 0.0
        %539 = vmatpush1.msra.mxu0 0.0
        %540 = vmatprep.subr.mxu0 0.0
        %541 = vmatpush1.msra.mxu0 0.0
        %542 = vmatprep.subr.mxu0 0.0
        %543 = vmatpush1.msra.mxu0 0.0
        %544 = vmatprep.subr.mxu0 0.0
        %545 = vmatpush1.msra.mxu0 0.0
        %546 = vmatprep.subr.mxu0 0.0
        %547 = vmatpush1.msra.mxu0 0.0
        %548 = vmatprep.subr.mxu0 0.0
        %549 = vmatpush1.msra.mxu0 0.0
        %550 = vmatprep.subr.mxu0 0.0
        %551 = vmatpush1.msra.mxu0 0.0
        %552 = vmatprep.subr.mxu0 0.0
        %553 = vmatpush1.msra.mxu0 0.0
        %554 = vmatprep.subr.mxu0 0.0
        %555 = vmatpush1.msra.mxu0 0.0
        %556 = vmatprep.subr.mxu0 0.0
        %557 = vmatpush1.msra.mxu0 0.0
        %558 = vmatprep.subr.mxu0 0.0
        %559 = vmatpush1.msra.mxu0 0.0
        %560 = vmatprep.subr.mxu0 0.0
        %561 = vmatpush1.msra.mxu0 0.0
        %562 = vmatprep.subr.mxu0 0.0
        %563 = vmatpush1.msra.mxu0 0.0
        %564 = vmatprep.subr.mxu0 0.0
        %565 = vmatpush1.msra.mxu0 0.0
        %566 = vmatprep.subr.mxu0 0.0
        %567 = vmatpush1.msra.mxu0 0.0
        %568 = vmatprep.subr.mxu0 0.0
        %569 = vmatpush1.msra.mxu0 0.0
        %570 = vmatprep.subr.mxu0 0.0
        %571 = vmatpush1.msra.mxu0 0.0
        %572 = vmatprep.subr.mxu0 0.0
        %573 = vmatpush1.msra.mxu0 0.0
        %574 = vmatprep.subr.mxu0 0.0
        %575 = vmatpush1.msra.mxu0 0.0
        %576 = vmatprep.mubr.f32.mxu0 0.0
        %577 = vmatmul.mubr.f32.gmra.mrb[0].mxu0 %v486
        %v578 = vpop.f32.mrb[0].mxu0
        %v579 = vadd.f32 %v447, %v578
        %v580 = vpop.f32.mrb[0].mxu0
        %581 = vmatprep.mubr.f32.mxu0 0.0
        %582 = vmatmul.mubr.f32.gmra.mrb[0].mxu0 %v489
        %v583 = vpop.f32.mrb[0].mxu0
        %v584 = vadd.f32 %v452, %v583
        %v585 = vpop.f32.mrb[0].mxu0
        %586 = vmatprep.mubr.f32.mxu0 0.0
        %587 = vmatmul.mubr.f32.gmra.mrb[0].mxu0 %v492
        %v588 = vpop.f32.mrb[0].mxu0
        %v589 = vadd.f32 %v457, %v588
        %v590 = vpop.f32.mrb[0].mxu0
        %591 = vmatprep.mubr.f32.mxu0 0.0
        %592 = vmatmul.mubr.f32.gmra.mrb[0].mxu0 %v495
        %v593 = vpop.f32.mrb[0].mxu0
        %v594 = vadd.f32 %v462, %v593
        %v595 = vpop.f32.mrb[0].mxu0
        %596 = vmatprep.mubr.f32.mxu0 0.0
        %597 = vmatmul.mubr.f32.gmra.mrb[0].mxu0 %v498
        %v598 = vpop.f32.mrb[0].mxu0
        %v599 = vadd.f32 %v467, %v598
        %v600 = vpop.f32.mrb[0].mxu0
        %601 = vmatprep.mubr.f32.mxu0 0.0
        %602 = vmatmul.mubr.f32.gmra.mrb[0].mxu0 %v501
        %v603 = vpop.f32.mrb[0].mxu0
        %v604 = vadd.f32 %v472, %v603
        %v605 = vpop.f32.mrb[0].mxu0
        %606 = vmatprep.mubr.f32.mxu0 0.0
        %607 = vmatmul.mubr.f32.gmra.mrb[0].mxu0 %v504
        %v608 = vpop.f32.mrb[0].mxu0
        %v609 = vadd.f32 %v477, %v608
        %v610 = vpop.f32.mrb[0].mxu0
        %611 = vmatprep.mubr.f32.mxu0 0.0
        %612 = vmatmul.mubr.f32.gmra.mrb[0].mxu0 %v507
        %v613 = vpop.f32.mrb[0].mxu0
        %v614 = vadd.f32 %v482, %v613
        %v615 = vpop.f32.mrb[0].mxu0
        %616 = vdwg.mxu0
        %v617 = vld [vmem:[#allocation2 + $0x2] sm:$0xff]
        %v618 = vld [vmem:[#allocation2 + $0xa] sm:$0xff]
        %v619 = vld [vmem:[#allocation2 + $0x1a] sm:$0xff]
        %v620 = vld [vmem:[#allocation2 + $0x22] sm:$0xff]
        %v621 = vld [vmem:[#allocation2 + $0x32] sm:$0xff]
        %v622 = vld [vmem:[#allocation2 + $0x3a] sm:$0xff]
        %v623 = vld [vmem:[#allocation2 + $0x4a] sm:$0xff]
        %v624 = vld [vmem:[#allocation2 + $0x52] sm:$0xff]
        %s625 = scalar_lea.vmem %s1, 8
        %v626 = vld [vmem:[%s625] sm:$0xf]
        %v628 = vsel %vm288, %v617, 0
        %v631 = vsel %vm288, %v618, 0
        %v634 = vsel %vm288, %v619, 0
        %v637 = vsel %vm288, %v620, 0
        %v640 = vsel %vm288, %v621, 0
        %v643 = vsel %vm288, %v622, 0
        %v646 = vsel %vm288, %v623, 0
        %v649 = vsel %vm288, %v624, 0
        %v652 = vsel %vm376, %v626, 0
        %654 = vmatprep.subr.mxu0 0.0
        %655 = vmatpush1.msra.mxu0 %v652
        %656 = vmatprep.subr.mxu0 0.0
        %657 = vmatpush1.msra.mxu0 0.0
        %658 = vmatprep.subr.mxu0 0.0
        %659 = vmatpush1.msra.mxu0 0.0
        %660 = vmatprep.subr.mxu0 0.0
        %661 = vmatpush1.msra.mxu0 0.0
        %662 = vmatprep.subr.mxu0 0.0
        %663 = vmatpush1.msra.mxu0 0.0
        %664 = vmatprep.subr.mxu0 0.0
        %665 = vmatpush1.msra.mxu0 0.0
        %666 = vmatprep.subr.mxu0 0.0
        %667 = vmatpush1.msra.mxu0 0.0
        %668 = vmatprep.subr.mxu0 0.0
        %669 = vmatpush1.msra.mxu0 0.0
        %670 = vmatprep.subr.mxu0 0.0
        %671 = vmatpush1.msra.mxu0 0.0
        %672 = vmatprep.subr.mxu0 0.0
        %673 = vmatpush1.msra.mxu0 0.0
        %674 = vmatprep.subr.mxu0 0.0
        %675 = vmatpush1.msra.mxu0 0.0
        %676 = vmatprep.subr.mxu0 0.0
        %677 = vmatpush1.msra.mxu0 0.0
        %678 = vmatprep.subr.mxu0 0.0
        %679 = vmatpush1.msra.mxu0 0.0
        %680 = vmatprep.subr.mxu0 0.0
        %681 = vmatpush1.msra.mxu0 0.0
        %682 = vmatprep.subr.mxu0 0.0
        %683 = vmatpush1.msra.mxu0 0.0
        %684 = vmatprep.subr.mxu0 0.0
        %685 = vmatpush1.msra.mxu0 0.0
        %686 = vmatprep.subr.mxu0 0.0
        %687 = vmatpush1.msra.mxu0 0.0
        %688 = vmatprep.subr.mxu0 0.0
        %689 = vmatpush1.msra.mxu0 0.0
        %690 = vmatprep.subr.mxu0 0.0
        %691 = vmatpush1.msra.mxu0 0.0
        %692 = vmatprep.subr.mxu0 0.0
        %693 = vmatpush1.msra.mxu0 0.0
        %694 = vmatprep.subr.mxu0 0.0
        %695 = vmatpush1.msra.mxu0 0.0
        %696 = vmatprep.subr.mxu0 0.0
        %697 = vmatpush1.msra.mxu0 0.0
        %698 = vmatprep.subr.mxu0 0.0
        %699 = vmatpush1.msra.mxu0 0.0
        %700 = vmatprep.subr.mxu0 0.0
        %701 = vmatpush1.msra.mxu0 0.0
        %702 = vmatprep.subr.mxu0 0.0
        %703 = vmatpush1.msra.mxu0 0.0
        %704 = vmatprep.subr.mxu0 0.0
        %705 = vmatpush1.msra.mxu0 0.0
        %706 = vmatprep.subr.mxu0 0.0
        %707 = vmatpush1.msra.mxu0 0.0
        %708 = vmatprep.subr.mxu0 0.0
        %709 = vmatpush1.msra.mxu0 0.0
        %710 = vmatprep.subr.mxu0 0.0
        %711 = vmatpush1.msra.mxu0 0.0
        %712 = vmatprep.subr.mxu0 0.0
        %713 = vmatpush1.msra.mxu0 0.0
        %714 = vmatprep.subr.mxu0 0.0
        %715 = vmatpush1.msra.mxu0 0.0
        %716 = vmatprep.subr.mxu0 0.0
        %717 = vmatpush1.msra.mxu0 0.0
        %718 = vmatprep.mubr.f32.mxu0 0.0
        %719 = vmatmul.mubr.f32.gmra.mrb[0].mxu0 %v628
        %v720 = vpop.f32.mrb[0].mxu0
        %v721 = vadd.f32 0.0, %v720
        %v722 = vpop.f32.mrb[0].mxu0
        %723 = vmatprep.mubr.f32.mxu0 0.0
        %724 = vmatmul.mubr.f32.gmra.mrb[0].mxu0 %v631
        %v725 = vpop.f32.mrb[0].mxu0
        %v726 = vadd.f32 0.0, %v725
        %v727 = vpop.f32.mrb[0].mxu0
        %728 = vmatprep.mubr.f32.mxu0 0.0
        %729 = vmatmul.mubr.f32.gmra.mrb[0].mxu0 %v634
        %v730 = vpop.f32.mrb[0].mxu0
        %v731 = vadd.f32 0.0, %v730
        %v732 = vpop.f32.mrb[0].mxu0
        %733 = vmatprep.mubr.f32.mxu0 0.0
        %734 = vmatmul.mubr.f32.gmra.mrb[0].mxu0 %v637
        %v735 = vpop.f32.mrb[0].mxu0
        %v736 = vadd.f32 0.0, %v735
        %v737 = vpop.f32.mrb[0].mxu0
        %738 = vmatprep.mubr.f32.mxu0 0.0
        %739 = vmatmul.mubr.f32.gmra.mrb[0].mxu0 %v640
        %v740 = vpop.f32.mrb[0].mxu0
        %v741 = vadd.f32 0.0, %v740
        %v742 = vpop.f32.mrb[0].mxu0
        %743 = vmatprep.mubr.f32.mxu0 0.0
        %744 = vmatmul.mubr.f32.gmra.mrb[0].mxu0 %v643
        %v745 = vpop.f32.mrb[0].mxu0
        %v746 = vadd.f32 0.0, %v745
        %v747 = vpop.f32.mrb[0].mxu0
        %748 = vmatprep.mubr.f32.mxu0 0.0
        %749 = vmatmul.mubr.f32.gmra.mrb[0].mxu0 %v646
        %v750 = vpop.f32.mrb[0].mxu0
        %v751 = vadd.f32 0.0, %v750
        %v752 = vpop.f32.mrb[0].mxu0
        %753 = vmatprep.mubr.f32.mxu0 0.0
        %754 = vmatmul.mubr.f32.gmra.mrb[0].mxu0 %v649
        %v755 = vpop.f32.mrb[0].mxu0
        %v756 = vadd.f32 0.0, %v755
        %v757 = vpop.f32.mrb[0].mxu0
        %758 = vdwg.mxu0
        %v759 = vadd.f32 %v579, %v721
        %v760 = vadd.f32 %v584, %v726
        %v761 = vadd.f32 %v589, %v731
        %v762 = vadd.f32 %v594, %v736
        %v763 = vadd.f32 %v599, %v741
        %v764 = vadd.f32 %v604, %v746
        %v765 = vadd.f32 %v609, %v751
        %v766 = vadd.f32 %v614, %v756
        %v767 = vld [vmem:[%s287] sm:$0xff]
        %v768 = vld [vmem:[%s287 + $0x8] sm:$0xff]
        %v769 = vld [vmem:[%s287 + $0x18] sm:$0xff]
        %v770 = vld [vmem:[%s287 + $0x20] sm:$0xff]
        %v771 = vld [vmem:[%s287 + $0x30] sm:$0xff]
        %v772 = vld [vmem:[%s287 + $0x38] sm:$0xff]
        %v773 = vld [vmem:[%s287 + $0x48] sm:$0xff]
        %v774 = vld [vmem:[%s287 + $0x50] sm:$0xff]
        %s775 = scalar_lea.vmem %s1, 12
        %v776 = vld [vmem:[%s775] sm:$0xf]
        %v778 = vsel %vm288, %v767, 0
        %v781 = vsel %vm288, %v768, 0
        %v784 = vsel %vm288, %v769, 0
        %v787 = vsel %vm288, %v770, 0
        %v790 = vsel %vm288, %v771, 0
        %v793 = vsel %vm288, %v772, 0
        %v796 = vsel %vm288, %v773, 0
        %v799 = vsel %vm288, %v774, 0
        %v802 = vsel %vm376, %v776, 0
        %804 = vmatprep.subr.mxu0 0.0
        %805 = vmatpush1.msra.mxu0 %v802
        %806 = vmatprep.subr.mxu0 0.0
        %807 = vmatpush1.msra.mxu0 0.0
        %808 = vmatprep.subr.mxu0 0.0
        %809 = vmatpush1.msra.mxu0 0.0
        %810 = vmatprep.subr.mxu0 0.0
        %811 = vmatpush1.msra.mxu0 0.0
        %812 = vmatprep.subr.mxu0 0.0
        %813 = vmatpush1.msra.mxu0 0.0
        %814 = vmatprep.subr.mxu0 0.0
        %815 = vmatpush1.msra.mxu0 0.0
        %816 = vmatprep.subr.mxu0 0.0
        %817 = vmatpush1.msra.mxu0 0.0
        %818 = vmatprep.subr.mxu0 0.0
        %819 = vmatpush1.msra.mxu0 0.0
        %820 = vmatprep.subr.mxu0 0.0
        %821 = vmatpush1.msra.mxu0 0.0
        %822 = vmatprep.subr.mxu0 0.0
        %823 = vmatpush1.msra.mxu0 0.0
        %824 = vmatprep.subr.mxu0 0.0
        %825 = vmatpush1.msra.mxu0 0.0
        %826 = vmatprep.subr.mxu0 0.0
        %827 = vmatpush1.msra.mxu0 0.0
        %828 = vmatprep.subr.mxu0 0.0
        %829 = vmatpush1.msra.mxu0 0.0
        %830 = vmatprep.subr.mxu0 0.0
        %831 = vmatpush1.msra.mxu0 0.0
        %832 = vmatprep.subr.mxu0 0.0
        %833 = vmatpush1.msra.mxu0 0.0
        %834 = vmatprep.subr.mxu0 0.0
        %835 = vmatpush1.msra.mxu0 0.0
        %836 = vmatprep.subr.mxu0 0.0
        %837 = vmatpush1.msra.mxu0 0.0
        %838 = vmatprep.subr.mxu0 0.0
        %839 = vmatpush1.msra.mxu0 0.0
        %840 = vmatprep.subr.mxu0 0.0
        %841 = vmatpush1.msra.mxu0 0.0
        %842 = vmatprep.subr.mxu0 0.0
        %843 = vmatpush1.msra.mxu0 0.0
        %844 = vmatprep.subr.mxu0 0.0
        %845 = vmatpush1.msra.mxu0 0.0
        %846 = vmatprep.subr.mxu0 0.0
        %847 = vmatpush1.msra.mxu0 0.0
        %848 = vmatprep.subr.mxu0 0.0
        %849 = vmatpush1.msra.mxu0 0.0
        %850 = vmatprep.subr.mxu0 0.0
        %851 = vmatpush1.msra.mxu0 0.0
        %852 = vmatprep.subr.mxu0 0.0
        %853 = vmatpush1.msra.mxu0 0.0
        %854 = vmatprep.subr.mxu0 0.0
        %855 = vmatpush1.msra.mxu0 0.0
        %856 = vmatprep.subr.mxu0 0.0
        %857 = vmatpush1.msra.mxu0 0.0
        %858 = vmatprep.subr.mxu0 0.0
        %859 = vmatpush1.msra.mxu0 0.0
        %860 = vmatprep.subr.mxu0 0.0
        %861 = vmatpush1.msra.mxu0 0.0
        %862 = vmatprep.subr.mxu0 0.0
        %863 = vmatpush1.msra.mxu0 0.0
        %864 = vmatprep.subr.mxu0 0.0
        %865 = vmatpush1.msra.mxu0 0.0
        %866 = vmatprep.subr.mxu0 0.0
        %867 = vmatpush1.msra.mxu0 0.0
        %868 = vmatprep.mubr.f32.mxu0 0.0
        %869 = vmatmul.mubr.f32.gmra.mrb[0].mxu0 %v778
        %v870 = vpop.f32.mrb[0].mxu0
        %v871 = vadd.f32 0.0, %v870
        %v872 = vpop.f32.mrb[0].mxu0
        %873 = vmatprep.mubr.f32.mxu0 0.0
        %874 = vmatmul.mubr.f32.gmra.mrb[0].mxu0 %v781
        %v875 = vpop.f32.mrb[0].mxu0
        %v876 = vadd.f32 0.0, %v875
        %v877 = vpop.f32.mrb[0].mxu0
        %878 = vmatprep.mubr.f32.mxu0 0.0
        %879 = vmatmul.mubr.f32.gmra.mrb[0].mxu0 %v784
        %v880 = vpop.f32.mrb[0].mxu0
        %v881 = vadd.f32 0.0, %v880
        %v882 = vpop.f32.mrb[0].mxu0
        %883 = vmatprep.mubr.f32.mxu0 0.0
        %884 = vmatmul.mubr.f32.gmra.mrb[0].mxu0 %v787
        %v885 = vpop.f32.mrb[0].mxu0
        %v886 = vadd.f32 0.0, %v885
        %v887 = vpop.f32.mrb[0].mxu0
        %888 = vmatprep.mubr.f32.mxu0 0.0
        %889 = vmatmul.mubr.f32.gmra.mrb[0].mxu0 %v790
        %v890 = vpop.f32.mrb[0].mxu0
        %v891 = vadd.f32 0.0, %v890
        %v892 = vpop.f32.mrb[0].mxu0
        %893 = vmatprep.mubr.f32.mxu0 0.0
        %894 = vmatmul.mubr.f32.gmra.mrb[0].mxu0 %v793
        %v895 = vpop.f32.mrb[0].mxu0
        %v896 = vadd.f32 0.0, %v895
        %v897 = vpop.f32.mrb[0].mxu0
        %898 = vmatprep.mubr.f32.mxu0 0.0
        %899 = vmatmul.mubr.f32.gmra.mrb[0].mxu0 %v796
        %v900 = vpop.f32.mrb[0].mxu0
        %v901 = vadd.f32 0.0, %v900
        %v902 = vpop.f32.mrb[0].mxu0
        %903 = vmatprep.mubr.f32.mxu0 0.0
        %904 = vmatmul.mubr.f32.gmra.mrb[0].mxu0 %v799
        %v905 = vpop.f32.mrb[0].mxu0
        %v906 = vadd.f32 0.0, %v905
        %v907 = vpop.f32.mrb[0].mxu0
        %908 = vdwg.mxu0
        %v909 = vadd.f32 %v759, %v871
        %v910 = vadd.f32 %v760, %v876
        %v911 = vadd.f32 %v761, %v881
        %v912 = vadd.f32 %v762, %v886
        %v913 = vadd.f32 %v763, %v891
        %v914 = vadd.f32 %v764, %v896
        %v915 = vadd.f32 %v765, %v901
        %v916 = vadd.f32 %v766, %v906
        %v917 = vld [vmem:[%s287 + $0x1] sm:$0xff]
        %v918 = vld [vmem:[%s287 + $0x9] sm:$0xff]
        %v919 = vld [vmem:[%s287 + $0x19] sm:$0xff]
        %v920 = vld [vmem:[%s287 + $0x21] sm:$0xff]
        %v921 = vld [vmem:[%s287 + $0x31] sm:$0xff]
        %v922 = vld [vmem:[%s287 + $0x39] sm:$0xff]
        %v923 = vld [vmem:[%s287 + $0x49] sm:$0xff]
        %v924 = vld [vmem:[%s287 + $0x51] sm:$0xff]
        %s925 = scalar_lea.vmem %s1, 16
        %v926 = vld [vmem:[%s925] sm:$0xf]
        %v928 = vsel %vm288, %v917, 0
        %v931 = vsel %vm288, %v918, 0
        %v934 = vsel %vm288, %v919, 0
        %v937 = vsel %vm288, %v920, 0
        %v940 = vsel %vm288, %v921, 0
        %v943 = vsel %vm288, %v922, 0
        %v946 = vsel %vm288, %v923, 0
        %v949 = vsel %vm288, %v924, 0
        %v952 = vsel %vm376, %v926, 0
        %954 = vmatprep.subr.mxu0 0.0
        %955 = vmatpush1.msra.mxu0 %v952
        %956 = vmatprep.subr.mxu0 0.0
        %957 = vmatpush1.msra.mxu0 0.0
        %958 = vmatprep.subr.mxu0 0.0
        %959 = vmatpush1.msra.mxu0 0.0
        %960 = vmatprep.subr.mxu0 0.0
        %961 = vmatpush1.msra.mxu0 0.0
        %962 = vmatprep.subr.mxu0 0.0
        %963 = vmatpush1.msra.mxu0 0.0
        %964 = vmatprep.subr.mxu0 0.0
        %965 = vmatpush1.msra.mxu0 0.0
        %966 = vmatprep.subr.mxu0 0.0
        %967 = vmatpush1.msra.mxu0 0.0
        %968 = vmatprep.subr.mxu0 0.0
        %969 = vmatpush1.msra.mxu0 0.0
        %970 = vmatprep.subr.mxu0 0.0
        %971 = vmatpush1.msra.mxu0 0.0
        %972 = vmatprep.subr.mxu0 0.0
        %973 = vmatpush1.msra.mxu0 0.0
        %974 = vmatprep.subr.mxu0 0.0
        %975 = vmatpush1.msra.mxu0 0.0
        %976 = vmatprep.subr.mxu0 0.0
        %977 = vmatpush1.msra.mxu0 0.0
        %978 = vmatprep.subr.mxu0 0.0
        %979 = vmatpush1.msra.mxu0 0.0
        %980 = vmatprep.subr.mxu0 0.0
        %981 = vmatpush1.msra.mxu0 0.0
        %982 = vmatprep.subr.mxu0 0.0
        %983 = vmatpush1.msra.mxu0 0.0
        %984 = vmatprep.subr.mxu0 0.0
        %985 = vmatpush1.msra.mxu0 0.0
        %986 = vmatprep.subr.mxu0 0.0
        %987 = vmatpush1.msra.mxu0 0.0
        %988 = vmatprep.subr.mxu0 0.0
        %989 = vmatpush1.msra.mxu0 0.0
        %990 = vmatprep.subr.mxu0 0.0
        %991 = vmatpush1.msra.mxu0 0.0
        %992 = vmatprep.subr.mxu0 0.0
        %993 = vmatpush1.msra.mxu0 0.0
        %994 = vmatprep.subr.mxu0 0.0
        %995 = vmatpush1.msra.mxu0 0.0
        %996 = vmatprep.subr.mxu0 0.0
        %997 = vmatpush1.msra.mxu0 0.0
        %998 = vmatprep.subr.mxu0 0.0
        %999 = vmatpush1.msra.mxu0 0.0
        %1000 = vmatprep.subr.mxu0 0.0
        %1001 = vmatpush1.msra.mxu0 0.0
        %1002 = vmatprep.subr.mxu0 0.0
        %1003 = vmatpush1.msra.mxu0 0.0
        %1004 = vmatprep.subr.mxu0 0.0
        %1005 = vmatpush1.msra.mxu0 0.0
        %1006 = vmatprep.subr.mxu0 0.0
        %1007 = vmatpush1.msra.mxu0 0.0
        %1008 = vmatprep.subr.mxu0 0.0
        %1009 = vmatpush1.msra.mxu0 0.0
        %1010 = vmatprep.subr.mxu0 0.0
        %1011 = vmatpush1.msra.mxu0 0.0
        %1012 = vmatprep.subr.mxu0 0.0
        %1013 = vmatpush1.msra.mxu0 0.0
        %1014 = vmatprep.subr.mxu0 0.0
        %1015 = vmatpush1.msra.mxu0 0.0
        %1016 = vmatprep.subr.mxu0 0.0
        %1017 = vmatpush1.msra.mxu0 0.0
        %1018 = vmatprep.mubr.f32.mxu0 0.0
        %1019 = vmatmul.mubr.f32.gmra.mrb[0].mxu0 %v928
        %v1020 = vpop.f32.mrb[0].mxu0
        %v1021 = vadd.f32 0.0, %v1020
        %v1022 = vpop.f32.mrb[0].mxu0
        %1023 = vmatprep.mubr.f32.mxu0 0.0
        %1024 = vmatmul.mubr.f32.gmra.mrb[0].mxu0 %v931
        %v1025 = vpop.f32.mrb[0].mxu0
        %v1026 = vadd.f32 0.0, %v1025
        %v1027 = vpop.f32.mrb[0].mxu0
        %1028 = vmatprep.mubr.f32.mxu0 0.0
        %1029 = vmatmul.mubr.f32.gmra.mrb[0].mxu0 %v934
        %v1030 = vpop.f32.mrb[0].mxu0
        %v1031 = vadd.f32 0.0, %v1030
        %v1032 = vpop.f32.mrb[0].mxu0
        %1033 = vmatprep.mubr.f32.mxu0 0.0
        %1034 = vmatmul.mubr.f32.gmra.mrb[0].mxu0 %v937
        %v1035 = vpop.f32.mrb[0].mxu0
        %v1036 = vadd.f32 0.0, %v1035
        %v1037 = vpop.f32.mrb[0].mxu0
        %1038 = vmatprep.mubr.f32.mxu0 0.0
        %1039 = vmatmul.mubr.f32.gmra.mrb[0].mxu0 %v940
        %v1040 = vpop.f32.mrb[0].mxu0
        %v1041 = vadd.f32 0.0, %v1040
        %v1042 = vpop.f32.mrb[0].mxu0
        %1043 = vmatprep.mubr.f32.mxu0 0.0
        %1044 = vmatmul.mubr.f32.gmra.mrb[0].mxu0 %v943
        %v1045 = vpop.f32.mrb[0].mxu0
        %v1046 = vadd.f32 0.0, %v1045
        %v1047 = vpop.f32.mrb[0].mxu0
        %1048 = vmatprep.mubr.f32.mxu0 0.0
        %1049 = vmatmul.mubr.f32.gmra.mrb[0].mxu0 %v946
        %v1050 = vpop.f32.mrb[0].mxu0
        %v1051 = vadd.f32 0.0, %v1050
        %v1052 = vpop.f32.mrb[0].mxu0
        %1053 = vmatprep.mubr.f32.mxu0 0.0
        %1054 = vmatmul.mubr.f32.gmra.mrb[0].mxu0 %v949
        %v1055 = vpop.f32.mrb[0].mxu0
        %v1056 = vadd.f32 0.0, %v1055
        %v1057 = vpop.f32.mrb[0].mxu0
        %1058 = vdwg.mxu0
        %v1059 = vadd.f32 %v909, %v1021
        %v1060 = vadd.f32 %v910, %v1026
        %v1061 = vadd.f32 %v911, %v1031
        %v1062 = vadd.f32 %v912, %v1036
        %v1063 = vadd.f32 %v913, %v1041
        %v1064 = vadd.f32 %v914, %v1046
        %v1065 = vadd.f32 %v915, %v1051
        %v1066 = vadd.f32 %v916, %v1056
        %v1067 = vld [vmem:[%s287 + $0x2] sm:$0xff]
        %v1068 = vld [vmem:[%s287 + $0xa] sm:$0xff]
        %v1069 = vld [vmem:[%s287 + $0x1a] sm:$0xff]
        %v1070 = vld [vmem:[%s287 + $0x22] sm:$0xff]
        %v1071 = vld [vmem:[%s287 + $0x32] sm:$0xff]
        %v1072 = vld [vmem:[%s287 + $0x3a] sm:$0xff]
        %v1073 = vld [vmem:[%s287 + $0x4a] sm:$0xff]
        %v1074 = vld [vmem:[%s287 + $0x52] sm:$0xff]
        %s1075 = scalar_lea.vmem %s1, 20
        %v1076 = vld [vmem:[%s1075] sm:$0xf]
        %v1078 = vsel %vm288, %v1067, 0
        %v1081 = vsel %vm288, %v1068, 0
        %v1084 = vsel %vm288, %v1069, 0
        %v1087 = vsel %vm288, %v1070, 0
        %v1090 = vsel %vm288, %v1071, 0
        %v1093 = vsel %vm288, %v1072, 0
        %v1096 = vsel %vm288, %v1073, 0
        %v1099 = vsel %vm288, %v1074, 0
        %v1102 = vsel %vm376, %v1076, 0
        %1104 = vmatprep.subr.mxu0 0.0
        %1105 = vmatpush1.msra.mxu0 %v1102
        %1106 = vmatprep.subr.mxu0 0.0
        %1107 = vmatpush1.msra.mxu0 0.0
        %1108 = vmatprep.subr.mxu0 0.0
        %1109 = vmatpush1.msra.mxu0 0.0
        %1110 = vmatprep.subr.mxu0 0.0
        %1111 = vmatpush1.msra.mxu0 0.0
        %1112 = vmatprep.subr.mxu0 0.0
        %1113 = vmatpush1.msra.mxu0 0.0
        %1114 = vmatprep.subr.mxu0 0.0
        %1115 = vmatpush1.msra.mxu0 0.0
        %1116 = vmatprep.subr.mxu0 0.0
        %1117 = vmatpush1.msra.mxu0 0.0
        %1118 = vmatprep.subr.mxu0 0.0
        %1119 = vmatpush1.msra.mxu0 0.0
        %1120 = vmatprep.subr.mxu0 0.0
        %1121 = vmatpush1.msra.mxu0 0.0
        %1122 = vmatprep.subr.mxu0 0.0
        %1123 = vmatpush1.msra.mxu0 0.0
        %1124 = vmatprep.subr.mxu0 0.0
        %1125 = vmatpush1.msra.mxu0 0.0
        %1126 = vmatprep.subr.mxu0 0.0
        %1127 = vmatpush1.msra.mxu0 0.0
        %1128 = vmatprep.subr.mxu0 0.0
        %1129 = vmatpush1.msra.mxu0 0.0
        %1130 = vmatprep.subr.mxu0 0.0
        %1131 = vmatpush1.msra.mxu0 0.0
        %1132 = vmatprep.subr.mxu0 0.0
        %1133 = vmatpush1.msra.mxu0 0.0
        %1134 = vmatprep.subr.mxu0 0.0
        %1135 = vmatpush1.msra.mxu0 0.0
        %1136 = vmatprep.subr.mxu0 0.0
        %1137 = vmatpush1.msra.mxu0 0.0
        %1138 = vmatprep.subr.mxu0 0.0
        %1139 = vmatpush1.msra.mxu0 0.0
        %1140 = vmatprep.subr.mxu0 0.0
        %1141 = vmatpush1.msra.mxu0 0.0
        %1142 = vmatprep.subr.mxu0 0.0
        %1143 = vmatpush1.msra.mxu0 0.0
        %1144 = vmatprep.subr.mxu0 0.0
        %1145 = vmatpush1.msra.mxu0 0.0
        %1146 = vmatprep.subr.mxu0 0.0
        %1147 = vmatpush1.msra.mxu0 0.0
        %1148 = vmatprep.subr.mxu0 0.0
        %1149 = vmatpush1.msra.mxu0 0.0
        %1150 = vmatprep.subr.mxu0 0.0
        %1151 = vmatpush1.msra.mxu0 0.0
        %1152 = vmatprep.subr.mxu0 0.0
        %1153 = vmatpush1.msra.mxu0 0.0
        %1154 = vmatprep.subr.mxu0 0.0
        %1155 = vmatpush1.msra.mxu0 0.0
        %1156 = vmatprep.subr.mxu0 0.0
        %1157 = vmatpush1.msra.mxu0 0.0
        %1158 = vmatprep.subr.mxu0 0.0
        %1159 = vmatpush1.msra.mxu0 0.0
        %1160 = vmatprep.subr.mxu0 0.0
        %1161 = vmatpush1.msra.mxu0 0.0
        %1162 = vmatprep.subr.mxu0 0.0
        %1163 = vmatpush1.msra.mxu0 0.0
        %1164 = vmatprep.subr.mxu0 0.0
        %1165 = vmatpush1.msra.mxu0 0.0
        %1166 = vmatprep.subr.mxu0 0.0
        %1167 = vmatpush1.msra.mxu0 0.0
        %1168 = vmatprep.mubr.f32.mxu0 0.0
        %1169 = vmatmul.mubr.f32.gmra.mrb[0].mxu0 %v1078
        %v1170 = vpop.f32.mrb[0].mxu0
        %v1171 = vadd.f32 0.0, %v1170
        %v1172 = vpop.f32.mrb[0].mxu0
        %1173 = vmatprep.mubr.f32.mxu0 0.0
        %1174 = vmatmul.mubr.f32.gmra.mrb[0].mxu0 %v1081
        %v1175 = vpop.f32.mrb[0].mxu0
        %v1176 = vadd.f32 0.0, %v1175
        %v1177 = vpop.f32.mrb[0].mxu0
        %1178 = vmatprep.mubr.f32.mxu0 0.0
        %1179 = vmatmul.mubr.f32.gmra.mrb[0].mxu0 %v1084
        %v1180 = vpop.f32.mrb[0].mxu0
        %v1181 = vadd.f32 0.0, %v1180
        %v1182 = vpop.f32.mrb[0].mxu0
        %1183 = vmatprep.mubr.f32.mxu0 0.0
        %1184 = vmatmul.mubr.f32.gmra.mrb[0].mxu0 %v1087
        %v1185 = vpop.f32.mrb[0].mxu0
        %v1186 = vadd.f32 0.0, %v1185
        %v1187 = vpop.f32.mrb[0].mxu0
        %1188 = vmatprep.mubr.f32.mxu0 0.0
        %1189 = vmatmul.mubr.f32.gmra.mrb[0].mxu0 %v1090
        %v1190 = vpop.f32.mrb[0].mxu0
        %v1191 = vadd.f32 0.0, %v1190
        %v1192 = vpop.f32.mrb[0].mxu0
        %1193 = vmatprep.mubr.f32.mxu0 0.0
        %1194 = vmatmul.mubr.f32.gmra.mrb[0].mxu0 %v1093
        %v1195 = vpop.f32.mrb[0].mxu0
        %v1196 = vadd.f32 0.0, %v1195
        %v1197 = vpop.f32.mrb[0].mxu0
        %1198 = vmatprep.mubr.f32.mxu0 0.0
        %1199 = vmatmul.mubr.f32.gmra.mrb[0].mxu0 %v1096
        %v1200 = vpop.f32.mrb[0].mxu0
        %v1201 = vadd.f32 0.0, %v1200
        %v1202 = vpop.f32.mrb[0].mxu0
        %1203 = vmatprep.mubr.f32.mxu0 0.0
        %1204 = vmatmul.mubr.f32.gmra.mrb[0].mxu0 %v1099
        %v1205 = vpop.f32.mrb[0].mxu0
        %v1206 = vadd.f32 0.0, %v1205
        %v1207 = vpop.f32.mrb[0].mxu0
        %1208 = vdwg.mxu0
        %v1209 = vadd.f32 %v1059, %v1171
        %v1210 = vadd.f32 %v1060, %v1176
        %v1211 = vadd.f32 %v1061, %v1181
        %v1212 = vadd.f32 %v1062, %v1186
        %v1213 = vadd.f32 %v1063, %v1191
        %v1214 = vadd.f32 %v1064, %v1196
        %v1215 = vadd.f32 %v1065, %v1201
        %v1216 = vadd.f32 %v1066, %v1206
        %s1217 = scalar_lea.vmem [#allocation2], 48
        %v1218 = vld [vmem:[%s1217] sm:$0xff]
        %v1219 = vld [vmem:[%s1217 + $0x8] sm:$0xff]
        %v1220 = vld [vmem:[%s1217 + $0x18] sm:$0xff]
        %v1221 = vld [vmem:[%s1217 + $0x20] sm:$0xff]
        %v1222 = vld [vmem:[%s1217 + $0x30] sm:$0xff]
        %v1223 = vld [vmem:[%s1217 + $0x38] sm:$0xff]
        %v1224 = vld [vmem:[%s1217 + $0x48] sm:$0xff]
        %v1225 = vld [vmem:[%s1217 + $0x50] sm:$0xff]
        %s1226 = scalar_lea.vmem %s1, 24
        %v1227 = vld [vmem:[%s1226] sm:$0xf]
        %v1229 = vsel %vm288, %v1218, 0
        %v1232 = vsel %vm288, %v1219, 0
        %v1235 = vsel %vm288, %v1220, 0
        %v1238 = vsel %vm288, %v1221, 0
        %v1241 = vsel %vm288, %v1222, 0
        %v1244 = vsel %vm288, %v1223, 0
        %v1247 = vsel %vm288, %v1224, 0
        %v1250 = vsel %vm288, %v1225, 0
        %v1253 = vsel %vm376, %v1227, 0
        %1255 = vmatprep.subr.mxu0 0.0
        %1256 = vmatpush1.msra.mxu0 %v1253
        %1257 = vmatprep.subr.mxu0 0.0
        %1258 = vmatpush1.msra.mxu0 0.0
        %1259 = vmatprep.subr.mxu0 0.0
        %1260 = vmatpush1.msra.mxu0 0.0
        %1261 = vmatprep.subr.mxu0 0.0
        %1262 = vmatpush1.msra.mxu0 0.0
        %1263 = vmatprep.subr.mxu0 0.0
        %1264 = vmatpush1.msra.mxu0 0.0
        %1265 = vmatprep.subr.mxu0 0.0
        %1266 = vmatpush1.msra.mxu0 0.0
        %1267 = vmatprep.subr.mxu0 0.0
        %1268 = vmatpush1.msra.mxu0 0.0
        %1269 = vmatprep.subr.mxu0 0.0
        %1270 = vmatpush1.msra.mxu0 0.0
        %1271 = vmatprep.subr.mxu0 0.0
        %1272 = vmatpush1.msra.mxu0 0.0
        %1273 = vmatprep.subr.mxu0 0.0
        %1274 = vmatpush1.msra.mxu0 0.0
        %1275 = vmatprep.subr.mxu0 0.0
        %1276 = vmatpush1.msra.mxu0 0.0
        %1277 = vmatprep.subr.mxu0 0.0
        %1278 = vmatpush1.msra.mxu0 0.0
        %1279 = vmatprep.subr.mxu0 0.0
        %1280 = vmatpush1.msra.mxu0 0.0
        %1281 = vmatprep.subr.mxu0 0.0
        %1282 = vmatpush1.msra.mxu0 0.0
        %1283 = vmatprep.subr.mxu0 0.0
        %1284 = vmatpush1.msra.mxu0 0.0
        %1285 = vmatprep.subr.mxu0 0.0
        %1286 = vmatpush1.msra.mxu0 0.0
        %1287 = vmatprep.subr.mxu0 0.0
        %1288 = vmatpush1.msra.mxu0 0.0
        %1289 = vmatprep.subr.mxu0 0.0
        %1290 = vmatpush1.msra.mxu0 0.0
        %1291 = vmatprep.subr.mxu0 0.0
        %1292 = vmatpush1.msra.mxu0 0.0
        %1293 = vmatprep.subr.mxu0 0.0
        %1294 = vmatpush1.msra.mxu0 0.0
        %1295 = vmatprep.subr.mxu0 0.0
        %1296 = vmatpush1.msra.mxu0 0.0
        %1297 = vmatprep.subr.mxu0 0.0
        %1298 = vmatpush1.msra.mxu0 0.0
        %1299 = vmatprep.subr.mxu0 0.0
        %1300 = vmatpush1.msra.mxu0 0.0
        %1301 = vmatprep.subr.mxu0 0.0
        %1302 = vmatpush1.msra.mxu0 0.0
        %1303 = vmatprep.subr.mxu0 0.0
        %1304 = vmatpush1.msra.mxu0 0.0
        %1305 = vmatprep.subr.mxu0 0.0
        %1306 = vmatpush1.msra.mxu0 0.0
        %1307 = vmatprep.subr.mxu0 0.0
        %1308 = vmatpush1.msra.mxu0 0.0
        %1309 = vmatprep.subr.mxu0 0.0
        %1310 = vmatpush1.msra.mxu0 0.0
        %1311 = vmatprep.subr.mxu0 0.0
        %1312 = vmatpush1.msra.mxu0 0.0
        %1313 = vmatprep.subr.mxu0 0.0
        %1314 = vmatpush1.msra.mxu0 0.0
        %1315 = vmatprep.subr.mxu0 0.0
        %1316 = vmatpush1.msra.mxu0 0.0
        %1317 = vmatprep.subr.mxu0 0.0
        %1318 = vmatpush1.msra.mxu0 0.0
        %1319 = vmatprep.mubr.f32.mxu0 0.0
        %1320 = vmatmul.mubr.f32.gmra.mrb[0].mxu0 %v1229
        %v1321 = vpop.f32.mrb[0].mxu0
        %v1322 = vadd.f32 0.0, %v1321
        %v1323 = vpop.f32.mrb[0].mxu0
        %1324 = vmatprep.mubr.f32.mxu0 0.0
        %1325 = vmatmul.mubr.f32.gmra.mrb[0].mxu0 %v1232
        %v1326 = vpop.f32.mrb[0].mxu0
        %v1327 = vadd.f32 0.0, %v1326
        %v1328 = vpop.f32.mrb[0].mxu0
        %1329 = vmatprep.mubr.f32.mxu0 0.0
        %1330 = vmatmul.mubr.f32.gmra.mrb[0].mxu0 %v1235
        %v1331 = vpop.f32.mrb[0].mxu0
        %v1332 = vadd.f32 0.0, %v1331
        %v1333 = vpop.f32.mrb[0].mxu0
        %1334 = vmatprep.mubr.f32.mxu0 0.0
        %1335 = vmatmul.mubr.f32.gmra.mrb[0].mxu0 %v1238
        %v1336 = vpop.f32.mrb[0].mxu0
        %v1337 = vadd.f32 0.0, %v1336
        %v1338 = vpop.f32.mrb[0].mxu0
        %1339 = vmatprep.mubr.f32.mxu0 0.0
        %1340 = vmatmul.mubr.f32.gmra.mrb[0].mxu0 %v1241
        %v1341 = vpop.f32.mrb[0].mxu0
        %v1342 = vadd.f32 0.0, %v1341
        %v1343 = vpop.f32.mrb[0].mxu0
        %1344 = vmatprep.mubr.f32.mxu0 0.0
        %1345 = vmatmul.mubr.f32.gmra.mrb[0].mxu0 %v1244
        %v1346 = vpop.f32.mrb[0].mxu0
        %v1347 = vadd.f32 0.0, %v1346
        %v1348 = vpop.f32.mrb[0].mxu0
        %1349 = vmatprep.mubr.f32.mxu0 0.0
        %1350 = vmatmul.mubr.f32.gmra.mrb[0].mxu0 %v1247
        %v1351 = vpop.f32.mrb[0].mxu0
        %v1352 = vadd.f32 0.0, %v1351
        %v1353 = vpop.f32.mrb[0].mxu0
        %1354 = vmatprep.mubr.f32.mxu0 0.0
        %1355 = vmatmul.mubr.f32.gmra.mrb[0].mxu0 %v1250
        %v1356 = vpop.f32.mrb[0].mxu0
        %v1357 = vadd.f32 0.0, %v1356
        %v1358 = vpop.f32.mrb[0].mxu0
        %1359 = vdwg.mxu0
        %v1360 = vadd.f32 %v1209, %v1322
        %v1361 = vadd.f32 %v1210, %v1327
        %v1362 = vadd.f32 %v1211, %v1332
        %v1363 = vadd.f32 %v1212, %v1337
        %v1364 = vadd.f32 %v1213, %v1342
        %v1365 = vadd.f32 %v1214, %v1347
        %v1366 = vadd.f32 %v1215, %v1352
        %v1367 = vadd.f32 %v1216, %v1357
        %v1368 = vld [vmem:[%s1217 + $0x1] sm:$0xff]
        %v1369 = vld [vmem:[%s1217 + $0x9] sm:$0xff]
        %v1370 = vld [vmem:[%s1217 + $0x19] sm:$0xff]
        %v1371 = vld [vmem:[%s1217 + $0x21] sm:$0xff]
        %v1372 = vld [vmem:[%s1217 + $0x31] sm:$0xff]
        %v1373 = vld [vmem:[%s1217 + $0x39] sm:$0xff]
        %v1374 = vld [vmem:[%s1217 + $0x49] sm:$0xff]
        %v1375 = vld [vmem:[%s1217 + $0x51] sm:$0xff]
        %s1376 = scalar_lea.vmem %s1, 28
        %v1377 = vld [vmem:[%s1376] sm:$0xf]
        %v1379 = vsel %vm288, %v1368, 0
        %v1382 = vsel %vm288, %v1369, 0
        %v1385 = vsel %vm288, %v1370, 0
        %v1388 = vsel %vm288, %v1371, 0
        %v1391 = vsel %vm288, %v1372, 0
        %v1394 = vsel %vm288, %v1373, 0
        %v1397 = vsel %vm288, %v1374, 0
        %v1400 = vsel %vm288, %v1375, 0
        %v1403 = vsel %vm376, %v1377, 0
        %1405 = vmatprep.subr.mxu0 0.0
        %1406 = vmatpush1.msra.mxu0 %v1403
        %1407 = vmatprep.subr.mxu0 0.0
        %1408 = vmatpush1.msra.mxu0 0.0
        %1409 = vmatprep.subr.mxu0 0.0
        %1410 = vmatpush1.msra.mxu0 0.0
        %1411 = vmatprep.subr.mxu0 0.0
        %1412 = vmatpush1.msra.mxu0 0.0
        %1413 = vmatprep.subr.mxu0 0.0
        %1414 = vmatpush1.msra.mxu0 0.0
        %1415 = vmatprep.subr.mxu0 0.0
        %1416 = vmatpush1.msra.mxu0 0.0
        %1417 = vmatprep.subr.mxu0 0.0
        %1418 = vmatpush1.msra.mxu0 0.0
        %1419 = vmatprep.subr.mxu0 0.0
        %1420 = vmatpush1.msra.mxu0 0.0
        %1421 = vmatprep.subr.mxu0 0.0
        %1422 = vmatpush1.msra.mxu0 0.0
        %1423 = vmatprep.subr.mxu0 0.0
        %1424 = vmatpush1.msra.mxu0 0.0
        %1425 = vmatprep.subr.mxu0 0.0
        %1426 = vmatpush1.msra.mxu0 0.0
        %1427 = vmatprep.subr.mxu0 0.0
        %1428 = vmatpush1.msra.mxu0 0.0
        %1429 = vmatprep.subr.mxu0 0.0
        %1430 = vmatpush1.msra.mxu0 0.0
        %1431 = vmatprep.subr.mxu0 0.0
        %1432 = vmatpush1.msra.mxu0 0.0
        %1433 = vmatprep.subr.mxu0 0.0
        %1434 = vmatpush1.msra.mxu0 0.0
        %1435 = vmatprep.subr.mxu0 0.0
        %1436 = vmatpush1.msra.mxu0 0.0
        %1437 = vmatprep.subr.mxu0 0.0
        %1438 = vmatpush1.msra.mxu0 0.0
        %1439 = vmatprep.subr.mxu0 0.0
        %1440 = vmatpush1.msra.mxu0 0.0
        %1441 = vmatprep.subr.mxu0 0.0
        %1442 = vmatpush1.msra.mxu0 0.0
        %1443 = vmatprep.subr.mxu0 0.0
        %1444 = vmatpush1.msra.mxu0 0.0
        %1445 = vmatprep.subr.mxu0 0.0
        %1446 = vmatpush1.msra.mxu0 0.0
        %1447 = vmatprep.subr.mxu0 0.0
        %1448 = vmatpush1.msra.mxu0 0.0
        %1449 = vmatprep.subr.mxu0 0.0
        %1450 = vmatpush1.msra.mxu0 0.0
        %1451 = vmatprep.subr.mxu0 0.0
        %1452 = vmatpush1.msra.mxu0 0.0
        %1453 = vmatprep.subr.mxu0 0.0
        %1454 = vmatpush1.msra.mxu0 0.0
        %1455 = vmatprep.subr.mxu0 0.0
        %1456 = vmatpush1.msra.mxu0 0.0
        %1457 = vmatprep.subr.mxu0 0.0
        %1458 = vmatpush1.msra.mxu0 0.0
        %1459 = vmatprep.subr.mxu0 0.0
        %1460 = vmatpush1.msra.mxu0 0.0
        %1461 = vmatprep.subr.mxu0 0.0
        %1462 = vmatpush1.msra.mxu0 0.0
        %1463 = vmatprep.subr.mxu0 0.0
        %1464 = vmatpush1.msra.mxu0 0.0
        %1465 = vmatprep.subr.mxu0 0.0
        %1466 = vmatpush1.msra.mxu0 0.0
        %1467 = vmatprep.subr.mxu0 0.0
        %1468 = vmatpush1.msra.mxu0 0.0
        %1469 = vmatprep.mubr.f32.mxu0 0.0
        %1470 = vmatmul.mubr.f32.gmra.mrb[0].mxu0 %v1379
        %v1471 = vpop.f32.mrb[0].mxu0
        %v1472 = vadd.f32 0.0, %v1471
        %v1473 = vpop.f32.mrb[0].mxu0
        %1474 = vmatprep.mubr.f32.mxu0 0.0
        %1475 = vmatmul.mubr.f32.gmra.mrb[0].mxu0 %v1382
        %v1476 = vpop.f32.mrb[0].mxu0
        %v1477 = vadd.f32 0.0, %v1476
        %v1478 = vpop.f32.mrb[0].mxu0
        %1479 = vmatprep.mubr.f32.mxu0 0.0
        %1480 = vmatmul.mubr.f32.gmra.mrb[0].mxu0 %v1385
        %v1481 = vpop.f32.mrb[0].mxu0
        %v1482 = vadd.f32 0.0, %v1481
        %v1483 = vpop.f32.mrb[0].mxu0
        %1484 = vmatprep.mubr.f32.mxu0 0.0
        %1485 = vmatmul.mubr.f32.gmra.mrb[0].mxu0 %v1388
        %v1486 = vpop.f32.mrb[0].mxu0
        %v1487 = vadd.f32 0.0, %v1486
        %v1488 = vpop.f32.mrb[0].mxu0
        %1489 = vmatprep.mubr.f32.mxu0 0.0
        %1490 = vmatmul.mubr.f32.gmra.mrb[0].mxu0 %v1391
        %v1491 = vpop.f32.mrb[0].mxu0
        %v1492 = vadd.f32 0.0, %v1491
        %v1493 = vpop.f32.mrb[0].mxu0
        %1494 = vmatprep.mubr.f32.mxu0 0.0
        %1495 = vmatmul.mubr.f32.gmra.mrb[0].mxu0 %v1394
        %v1496 = vpop.f32.mrb[0].mxu0
        %v1497 = vadd.f32 0.0, %v1496
        %v1498 = vpop.f32.mrb[0].mxu0
        %1499 = vmatprep.mubr.f32.mxu0 0.0
        %1500 = vmatmul.mubr.f32.gmra.mrb[0].mxu0 %v1397
        %v1501 = vpop.f32.mrb[0].mxu0
        %v1502 = vadd.f32 0.0, %v1501
        %v1503 = vpop.f32.mrb[0].mxu0
        %1504 = vmatprep.mubr.f32.mxu0 0.0
        %1505 = vmatmul.mubr.f32.gmra.mrb[0].mxu0 %v1400
        %v1506 = vpop.f32.mrb[0].mxu0
        %v1507 = vadd.f32 0.0, %v1506
        %v1508 = vpop.f32.mrb[0].mxu0
        %1509 = vdwg.mxu0
        %v1510 = vadd.f32 %v1360, %v1472
        %v1511 = vadd.f32 %v1361, %v1477
        %v1512 = vadd.f32 %v1362, %v1482
        %v1513 = vadd.f32 %v1363, %v1487
        %v1514 = vadd.f32 %v1364, %v1492
        %v1515 = vadd.f32 %v1365, %v1497
        %v1516 = vadd.f32 %v1366, %v1502
        %v1517 = vadd.f32 %v1367, %v1507
        %v1518 = vld [vmem:[%s1217 + $0x2] sm:$0xff]
        %v1519 = vld [vmem:[%s1217 + $0xa] sm:$0xff]
        %v1520 = vld [vmem:[%s1217 + $0x1a] sm:$0xff]
        %v1521 = vld [vmem:[%s1217 + $0x22] sm:$0xff]
        %v1522 = vld [vmem:[%s1217 + $0x32] sm:$0xff]
        %v1523 = vld [vmem:[%s1217 + $0x3a] sm:$0xff]
        %v1524 = vld [vmem:[%s1217 + $0x4a] sm:$0xff]
        %v1525 = vld [vmem:[%s1217 + $0x52] sm:$0xff]
        %s1526 = scalar_lea.vmem %s1, 32
        %v1527 = vld [vmem:[%s1526] sm:$0xf]
        %v1529 = vsel %vm288, %v1518, 0
        %v1532 = vsel %vm288, %v1519, 0
        %v1535 = vsel %vm288, %v1520, 0
        %v1538 = vsel %vm288, %v1521, 0
        %v1541 = vsel %vm288, %v1522, 0
        %v1544 = vsel %vm288, %v1523, 0
        %v1547 = vsel %vm288, %v1524, 0
        %v1550 = vsel %vm288, %v1525, 0
        %v1553 = vsel %vm376, %v1527, 0
        %1555 = vmatprep.subr.mxu0 0.0
        %1556 = vmatpush1.msra.mxu0 %v1553
        %1557 = vmatprep.subr.mxu0 0.0
        %1558 = vmatpush1.msra.mxu0 0.0
        %1559 = vmatprep.subr.mxu0 0.0
        %1560 = vmatpush1.msra.mxu0 0.0
        %1561 = vmatprep.subr.mxu0 0.0
        %1562 = vmatpush1.msra.mxu0 0.0
        %1563 = vmatprep.subr.mxu0 0.0
        %1564 = vmatpush1.msra.mxu0 0.0
        %1565 = vmatprep.subr.mxu0 0.0
        %1566 = vmatpush1.msra.mxu0 0.0
        %1567 = vmatprep.subr.mxu0 0.0
        %1568 = vmatpush1.msra.mxu0 0.0
        %1569 = vmatprep.subr.mxu0 0.0
        %1570 = vmatpush1.msra.mxu0 0.0
        %1571 = vmatprep.subr.mxu0 0.0
        %1572 = vmatpush1.msra.mxu0 0.0
        %1573 = vmatprep.subr.mxu0 0.0
        %1574 = vmatpush1.msra.mxu0 0.0
        %1575 = vmatprep.subr.mxu0 0.0
        %1576 = vmatpush1.msra.mxu0 0.0
        %1577 = vmatprep.subr.mxu0 0.0
        %1578 = vmatpush1.msra.mxu0 0.0
        %1579 = vmatprep.subr.mxu0 0.0
        %1580 = vmatpush1.msra.mxu0 0.0
        %1581 = vmatprep.subr.mxu0 0.0
        %1582 = vmatpush1.msra.mxu0 0.0
        %1583 = vmatprep.subr.mxu0 0.0
        %1584 = vmatpush1.msra.mxu0 0.0
        %1585 = vmatprep.subr.mxu0 0.0
        %1586 = vmatpush1.msra.mxu0 0.0
        %1587 = vmatprep.subr.mxu0 0.0
        %1588 = vmatpush1.msra.mxu0 0.0
        %1589 = vmatprep.subr.mxu0 0.0
        %1590 = vmatpush1.msra.mxu0 0.0
        %1591 = vmatprep.subr.mxu0 0.0
        %1592 = vmatpush1.msra.mxu0 0.0
        %1593 = vmatprep.subr.mxu0 0.0
        %1594 = vmatpush1.msra.mxu0 0.0
        %1595 = vmatprep.subr.mxu0 0.0
        %1596 = vmatpush1.msra.mxu0 0.0
        %1597 = vmatprep.subr.mxu0 0.0
        %1598 = vmatpush1.msra.mxu0 0.0
        %1599 = vmatprep.subr.mxu0 0.0
        %1600 = vmatpush1.msra.mxu0 0.0
        %1601 = vmatprep.subr.mxu0 0.0
        %1602 = vmatpush1.msra.mxu0 0.0
        %1603 = vmatprep.subr.mxu0 0.0
        %1604 = vmatpush1.msra.mxu0 0.0
        %1605 = vmatprep.subr.mxu0 0.0
        %1606 = vmatpush1.msra.mxu0 0.0
        %1607 = vmatprep.subr.mxu0 0.0
        %1608 = vmatpush1.msra.mxu0 0.0
        %1609 = vmatprep.subr.mxu0 0.0
        %1610 = vmatpush1.msra.mxu0 0.0
        %1611 = vmatprep.subr.mxu0 0.0
        %1612 = vmatpush1.msra.mxu0 0.0
        %1613 = vmatprep.subr.mxu0 0.0
        %1614 = vmatpush1.msra.mxu0 0.0
        %1615 = vmatprep.subr.mxu0 0.0
        %1616 = vmatpush1.msra.mxu0 0.0
        %1617 = vmatprep.subr.mxu0 0.0
        %1618 = vmatpush1.msra.mxu0 0.0
        %1619 = vmatprep.mubr.f32.mxu0 0.0
        %1620 = vmatmul.mubr.f32.gmra.mrb[0].mxu0 %v1529
        %v1621 = vpop.f32.mrb[0].mxu0
        %v1622 = vadd.f32 0.0, %v1621
        %v1623 = vpop.f32.mrb[0].mxu0
        %1624 = vmatprep.mubr.f32.mxu0 0.0
        %1625 = vmatmul.mubr.f32.gmra.mrb[0].mxu0 %v1532
        %v1626 = vpop.f32.mrb[0].mxu0
        %v1627 = vadd.f32 0.0, %v1626
        %v1628 = vpop.f32.mrb[0].mxu0
        %1629 = vmatprep.mubr.f32.mxu0 0.0
        %1630 = vmatmul.mubr.f32.gmra.mrb[0].mxu0 %v1535
        %v1631 = vpop.f32.mrb[0].mxu0
        %v1632 = vadd.f32 0.0, %v1631
        %v1633 = vpop.f32.mrb[0].mxu0
        %1634 = vmatprep.mubr.f32.mxu0 0.0
        %1635 = vmatmul.mubr.f32.gmra.mrb[0].mxu0 %v1538
        %v1636 = vpop.f32.mrb[0].mxu0
        %v1637 = vadd.f32 0.0, %v1636
        %v1638 = vpop.f32.mrb[0].mxu0
        %1639 = vmatprep.mubr.f32.mxu0 0.0
        %1640 = vmatmul.mubr.f32.gmra.mrb[0].mxu0 %v1541
        %v1641 = vpop.f32.mrb[0].mxu0
        %v1642 = vadd.f32 0.0, %v1641
        %v1643 = vpop.f32.mrb[0].mxu0
        %1644 = vmatprep.mubr.f32.mxu0 0.0
        %1645 = vmatmul.mubr.f32.gmra.mrb[0].mxu0 %v1544
        %v1646 = vpop.f32.mrb[0].mxu0
        %v1647 = vadd.f32 0.0, %v1646
        %v1648 = vpop.f32.mrb[0].mxu0
        %1649 = vmatprep.mubr.f32.mxu0 0.0
        %1650 = vmatmul.mubr.f32.gmra.mrb[0].mxu0 %v1547
        %v1651 = vpop.f32.mrb[0].mxu0
        %v1652 = vadd.f32 0.0, %v1651
        %v1653 = vpop.f32.mrb[0].mxu0
        %1654 = vmatprep.mubr.f32.mxu0 0.0
        %1655 = vmatmul.mubr.f32.gmra.mrb[0].mxu0 %v1550
        %v1656 = vpop.f32.mrb[0].mxu0
        %v1657 = vadd.f32 0.0, %v1656
        %v1658 = vpop.f32.mrb[0].mxu0
        %1659 = vdwg.mxu0
        %v1660 = vadd.f32 %v1510, %v1622
        %v1661 = vadd.f32 %v1511, %v1627
        %v1662 = vadd.f32 %v1512, %v1632
        %v1663 = vadd.f32 %v1513, %v1637
        %v1664 = vadd.f32 %v1514, %v1642
        %v1665 = vadd.f32 %v1515, %v1647
        %v1666 = vadd.f32 %v1516, %v1652
        %v1667 = vadd.f32 %v1517, %v1657
        %1668 = vst.msk [vmem:[%s261] sm:$0xff] %vm288, %v1660
        %1669 = vst.msk [vmem:[%s261 + $0x8] sm:$0xff] %vm288, %v1661
        %1670 = vst.msk [vmem:[%s261 + $0x10] sm:$0xff] %vm288, %v1662
        %1671 = vst.msk [vmem:[%s261 + $0x18] sm:$0xff] %vm288, %v1663
        %1672 = vst.msk [vmem:[%s261 + $0x20] sm:$0xff] %vm288, %v1664
        %1673 = vst.msk [vmem:[%s261 + $0x28] sm:$0xff] %vm288, %v1665
        %1674 = vst.msk [vmem:[%s261 + $0x30] sm:$0xff] %vm288, %v1666
        %1675 = vst.msk [vmem:[%s261 + $0x38] sm:$0xff] %vm288, %v1667
        %v1676 = vsel %vm288, %v1660, 0.0
        %v1677 = vsel %vm288, %v1661, 0.0
        %v1678 = vadd.f32 %v1676, %v1677
        %v1679 = vsel %vm288, %v1662, 0.0
        %v1680 = vadd.f32 %v1678, %v1679
        %v1681 = vsel %vm288, %v1663, 0.0
        %v1682 = vadd.f32 %v1680, %v1681
        %v1683 = vsel %vm288, %v1664, 0.0
        %v1684 = vadd.f32 %v1682, %v1683
        %v1685 = vsel %vm288, %v1665, 0.0
        %v1686 = vadd.f32 %v1684, %v1685
        %v1687 = vsel %vm288, %v1666, 0.0
        %v1688 = vadd.f32 %v1686, %v1687
        %v1689 = vsel %vm288, %v1667, 0.0
        %v1690 = vadd.f32 %v1688, %v1689
        %v1691 = vrot.slane %v1690, 4
        %v1692 = vadd.f32 %v1690, %v1691
        %v1693 = vrot.slane %v1692, 2
        %v1694 = vadd.f32 %v1692, %v1693
        %v1695 = vrot.slane %v1694, 1
        %v1696 = vadd.f32 %v1694, %v1695
        %v1697 = vmul.f32 %v1696, 0.015625
        %v1698 = vsub.f32 %v1660, %v1697
        %v1699 = vsub.f32 %v1661, %v1697
        %v1700 = vsub.f32 %v1662, %v1697
        %v1701 = vsub.f32 %v1663, %v1697
        %v1702 = vsub.f32 %v1664, %v1697
        %v1703 = vsub.f32 %v1665, %v1697
        %v1704 = vsub.f32 %v1666, %v1697
        %v1705 = vsub.f32 %v1667, %v1697
        %v1706 = vmul.f32 %v1698, %v1698
        %v1707 = vmul.f32 %v1699, %v1699
        %v1708 = vmul.f32 %v1700, %v1700
        %v1709 = vmul.f32 %v1701, %v1701
        %v1710 = vmul.f32 %v1702, %v1702
        %v1711 = vmul.f32 %v1703, %v1703
        %v1712 = vmul.f32 %v1704, %v1704
        %v1713 = vmul.f32 %v1705, %v1705
        %v1714 = vsel %vm288, %v1706, 0.0
        %v1715 = vsel %vm288, %v1707, 0.0
        %v1716 = vadd.f32 %v1714, %v1715
        %v1717 = vsel %vm288, %v1708, 0.0
        %v1718 = vadd.f32 %v1716, %v1717
        %v1719 = vsel %vm288, %v1709, 0.0
        %v1720 = vadd.f32 %v1718, %v1719
        %v1721 = vsel %vm288, %v1710, 0.0
        %v1722 = vadd.f32 %v1720, %v1721
        %v1723 = vsel %vm288, %v1711, 0.0
        %v1724 = vadd.f32 %v1722, %v1723
        %v1725 = vsel %vm288, %v1712, 0.0
        %v1726 = vadd.f32 %v1724, %v1725
        %v1727 = vsel %vm288, %v1713, 0.0
        %v1728 = vadd.f32 %v1726, %v1727
        %v1729 = vrot.slane %v1728, 4
        %v1730 = vadd.f32 %v1728, %v1729
        %v1731 = vrot.slane %v1730, 2
        %v1732 = vadd.f32 %v1730, %v1731
        %v1733 = vrot.slane %v1732, 1
        %v1734 = vadd.f32 %v1732, %v1733
        %vm1735 = vcmask 1040384
        %v1736 = vsel %vm1735, %v1696, %v1734
        %vm1737 = vcmask 25600
        %1738 = vst.msk [vmem:[%s246] sm:$0x3] %vm1737, %v1736
        %s1739 = smul.u32 4, %s25
        %p1740 = scmp.lt.s32.totalorder %s24, 1
        %s1741 = scalar_select %p1740, %s24, 1
        %p1742 = scmp.lt.s32.totalorder %s1739, 15
        %s1743 = scalar_select %p1742, %s1739, 15
        %s1744 = smul.addr %s1743, 2
        %s1745 = smul.addr %s1741, 32
        %s1746 = sadd.s32 %s1744, %s1745
        %s1747 = smul.addr %s1746, 8
        %s1748 = scalar_lea.vmem %s4, %s1747
        %s1749 = sand.u32 %s159, 1
        %s1750 = scalar_lea.sflag [#allocation4], %s1749
        %s1751 = sand.u32 %s159, 1
        %s1752 = smul.addr %s1751, 2
        %s1753 = scalar_lea.vmem [#allocation3], %s1752
        // Predicated region
        $region53: #{tpu_custom_call.1} parent=35 // pred_check
          %p1754 = pneg %p141
        $region54: #{tpu_custom_call.1} parent=35 // pred_check_branch
          %1756 = sbr.rel (%p1754) target = $region56
        $region55: #{tpu_custom_call.1} parent=35 // pred_region
          %s1757 = smul.u32 4, %s25
        $region56: #{tpu_custom_call.1} parent=35 // pred_fallthru
          _
        // Predicated region
        $region57: #{tpu_custom_call.1} parent=35 // pred_check
          %p1758 = pneg %p169
        $region58: #{tpu_custom_call.1} parent=35 // pred_check_branch
          %1760 = sbr.rel (%p1758) target = $region60
        $region59: #{tpu_custom_call.1} parent=35 // pred_region
          %s1762 = ssub.s32 32, 32
          %1763 = vsyncadd %s1750, %s1762
          %s1764 = smul.addr %s24, 4
          %s1765 = sadd.s32 %s25, %s1764
          %s1766 = smul.addr %s1765, 32
          %s1767 = scalar_lea.hbm %s5, %s1766
          %s1769 = sshll.u32 %s1753, 4
          %s1770 = int_to_ptr.vmem [resolvable:$true] %s1769
          %1772 = dma.vmem_to_hbm [thread:$0]  %s1770, 32, %s1767, %s1750
        $region60: #{tpu_custom_call.1} parent=35 // pred_fallthru
          _
      $region36: #{tpu_custom_call.1} parent=5 // pred_fallthru
        _
      %p1773 = scmp.le.s32.totalorder 2, %s15
      // Predicated region
      $region61: #{tpu_custom_call.1} parent=5 // pred_check
        %p1774 = pneg %p1773
      $region62: #{tpu_custom_call.1} parent=5 // pred_check_branch
        %1776 = sbr.rel (%p1774) target = $region64
      $region63: #{tpu_custom_call.1} parent=5 // pred_region
        %s1777 = ssub.s32 %s15, 2
        // Predicated region
        $region65: #{tpu_custom_call.1} parent=63 // pred_check
          %p1778 = pneg %p147
        $region66: #{tpu_custom_call.1} parent=63 // pred_check_branch
          %1780 = sbr.rel (%p1778) target = $region68
        $region67: #{tpu_custom_call.1} parent=63 // pred_region
          %s1781 = smul.u32 4, %s27
          %p1782 = scmp.lt.s32.totalorder %s26, 1
          %s1783 = scalar_select %p1782, %s26, 1
          %p1784 = scmp.lt.s32.totalorder %s1781, 15
          %s1785 = scalar_select %p1784, %s1781, 15
          %s1786 = smul.addr %s1785, 2
          %s1787 = smul.addr %s1783, 32
          %s1788 = sadd.s32 %s1786, %s1787
          %s1789 = smul.addr %s1788, 8
          %s1790 = scalar_lea.vmem %s4, %s1789
        $region68: #{tpu_custom_call.1} parent=63 // pred_fallthru
          _
        // Predicated region
        $region69: #{tpu_custom_call.1} parent=63 // pred_check
          %p1791 = pneg %p175
        $region70: #{tpu_custom_call.1} parent=63 // pred_check_branch
          %1793 = sbr.rel (%p1791) target = $region72
        $region71: #{tpu_custom_call.1} parent=63 // pred_region
          %s1794 = sand.u32 %s160, 1
          %s1795 = scalar_lea.sflag [#allocation4], %s1794
          %s1796 = sand.u32 %s160, 1
          %s1797 = smul.addr %s1796, 2
          %s1798 = scalar_lea.vmem [#allocation3], %s1797
          %1799 = dma.done %s1795, 32
        $region72: #{tpu_custom_call.1} parent=63 // pred_fallthru
          _
      $region64: #{tpu_custom_call.1} parent=5 // pred_fallthru
        _
    $region6: #{tpu_custom_call.1} parent=1 // loop_footer
      %s19 = sadd.s32 1, %s15
    $region7: #{tpu_custom_call.1} parent=1 // loop_footer_branch
      %14 = sbr.rel target = $region3
    $region8: #{tpu_custom_call.1} parent=1 // loop_exit
      _
    %1800 = vsyncpa [#allocation4], 1
    %s1801 = scalar_lea.sflag [#allocation4], 1
    %1802 = vsyncpa %s1801, 1

</llo_original>
